<compile_context>
chip_gen: v6e
topology: v6e:2x2x1
jax: 0.10.0
libtpu: 0.0.40
codegen_flags: <defaults>
</compile_context>

<pallas_src>
import functools

import jax
import jax.numpy as jnp
from jax import lax
from jax.experimental import pallas as pl
from jax.experimental.pallas import tpu as pltpu

EPS = 1e-5


def _conv3x3(act, w_ref, col_ref):
    """3x3 / stride-1 / pad-1 conv of one image.

    act:     (H, W, C) value in compute dtype (MXU operand dtype).
    w_ref:   (3, 3C, C) ref, compute dtype; w_ref[dy][dx*C + ci, co] = w[dy, dx, ci, co].
    col_ref: (H+2, W, 3C) VMEM scratch, compute dtype (dx packed on channels).
    returns: (H*W, C) float32 conv output.
    """
    H, W, C = act.shape
    cd = col_ref.dtype
    zrow = jnp.zeros((1, W, 3 * C), cd)
    zcol = jnp.zeros((H, 1, C), cd)

    # thin H-halo rows only (interior rows are fully overwritten below)
    col_ref[0:1] = zrow
    col_ref[H + 1:H + 2] = zrow
    # dx-shifted strips; left/right edge columns zeroed as part of the shift
    col_ref[1:H + 1, :, 0:C] = jnp.concatenate([zcol, act[:, :W - 1, :]], axis=1)
    col_ref[1:H + 1, :, C:2 * C] = act
    col_ref[1:H + 1, :, 2 * C:3 * C] = jnp.concatenate([act[:, 1:, :], zcol], axis=1)

    # 3 accumulated MXU matmuls over dy, contraction depth K = 3C, f32 accumulation.
    acc = jnp.zeros((H * W, C), jnp.float32)
    for dy in range(3):
        lhs = col_ref[dy:dy + H].reshape(H * W, 3 * C)
        acc = acc + jnp.dot(lhs, w_ref[dy], preferred_element_type=jnp.float32)
    return acc


def _bn_scale_shift(s_ref, q_ref, g_ref, b_ref, inv_m):
    """Per-channel (scale, shift) for training-mode BN from per-image partials."""
    s = jnp.sum(s_ref[...], axis=0)              # (1, C) total sum
    q = jnp.sum(q_ref[...], axis=0)              # (1, C) total sum of squares
    mean = s * inv_m
    var = q * inv_m - mean * mean                # biased variance
    scale = g_ref[...] * lax.rsqrt(var + EPS)
    shift = b_ref[...] - mean * scale
    return scale, shift


def _conv1_kernel(x_ref, w_ref, h_ref, s_ref, q_ref, col_ref, *, compute_dtype):
    _, H, W, C = x_ref.shape
    act = x_ref[0].astype(compute_dtype)
    h = _conv3x3(act, w_ref, col_ref)                        # (H*W, C) f32
    h_ref[...] = h.reshape(1, H, W, C).astype(h_ref.dtype)
    s_ref[...] = jnp.sum(h, axis=0).reshape(1, 1, C)
    q_ref[...] = jnp.sum(h * h, axis=0).reshape(1, 1, C)


def _bn_relu_conv2_kernel(h1_ref, s1_ref, q1_ref, g1_ref, b1_ref, w2_ref,
                          h2_ref, s2_ref, q2_ref, col_ref, *,
                          inv_m, compute_dtype):
    _, H, W, C = h1_ref.shape
    scale, shift = _bn_scale_shift(s1_ref, q1_ref, g1_ref, b1_ref, inv_m)
    a = jnp.maximum(h1_ref[0].astype(jnp.float32) * scale + shift, 0.0)
    h = _conv3x3(a.astype(compute_dtype), w2_ref, col_ref)   # (H*W, C) f32
    h2_ref[...] = h.reshape(1, H, W, C).astype(h2_ref.dtype)
    s2_ref[...] = jnp.sum(h, axis=0).reshape(1, 1, C)
    q2_ref[...] = jnp.sum(h * h, axis=0).reshape(1, 1, C)


def _bn_residual_kernel(h2_ref, s2_ref, q2_ref, g2_ref, b2_ref, x_ref, o_ref, *, inv_m):
    scale, shift = _bn_scale_shift(s2_ref, q2_ref, g2_ref, b2_ref, inv_m)
    h = h2_ref[0].astype(jnp.float32) * scale + shift
    out = jnp.maximum(h + x_ref[0].astype(jnp.float32), 0.0)
    o_ref[...] = out[None].astype(o_ref.dtype)


def basic_block(x_nchw, w1, g1, b1, w2, g2, b2, *, compute_dtype=jnp.float32):
    # x_nchw: (N, C, H, W) -- PyTorch layout at the module boundary.
    # w1, w2: (3, 3, Cin, Cout) HWIO.
    x = jnp.transpose(x_nchw, (0, 2, 3, 1))                  # -> NHWC
    N, H, W, C = x.shape
    kh, kw, cin, cout = w1.shape
    # Covered BasicBlock config: stride=1, inplanes == planes, no downsample.
    # TODO(synk): stride != 1 / downsample variants are not implemented here.
    assert (kh, kw) == (3, 3) and cin == C and cout == C

    cd = compute_dtype
    inv_m = 1.0 / float(N * H * W)

    # Pre-reshape to (dy, dx*C + ci, co) and pre-cast weights once in the wrapper.
    w1p = w1.reshape(3, 3 * C, C).astype(cd)
    w2p = w2.reshape(3, 3 * C, C).astype(cd)
    g1p, b1p = g1.reshape(1, C).astype(jnp.float32), b1.reshape(1, C).astype(jnp.float32)
    g2p, b2p = g2.reshape(1, C).astype(jnp.float32), b2.reshape(1, C).astype(jnp.float32)

    img_spec = pl.BlockSpec((1, H, W, C), lambda n: (n, 0, 0, 0))
    stat_out_spec = pl.BlockSpec((1, 1, C), lambda n: (n, 0, 0))
    stat_in_spec = pl.BlockSpec((N, 1, C), lambda n: (0, 0, 0))
    vec_spec = pl.BlockSpec((1, C), lambda n: (0, 0))
    w_spec = pl.BlockSpec((3, 3 * C, C), lambda n: (0, 0, 0))
    col_scratch = pltpu.VMEM((H + 2, W, 3 * C), cd)

    itemsize = jnp.dtype(cd).itemsize
    img_bytes = H * W * C * 4                                 # f32 working values
    col_bytes = (H + 2) * W * 3 * C * itemsize
    params = pltpu.CompilerParams(
        dimension_semantics=("parallel",),                    # megacore over images (v7x)
        # double-buffered image blocks + slab + f32 working values + headroom,
        # clipped to stay inside v7x's 64 MiB physical VMEM.
        vmem_limit_bytes=int(min(max(8 * img_bytes + 2 * col_bytes + (8 << 20),
                                     32 << 20), 64 << 20)),
    )

    stat_shape = jax.ShapeDtypeStruct((N, 1, C), jnp.float32)
    act_shape = jax.ShapeDtypeStruct((N, H, W, C), cd)

    # pass 1: conv1 + per-image BN1 partial stats
    h1, s1, q1 = pl.pallas_call(
        functools.partial(_conv1_kernel, compute_dtype=cd),
        grid=(N,),
        in_specs=[img_spec, w_spec],
        out_specs=(img_spec, stat_out_spec, stat_out_spec),
        out_shape=(act_shape, stat_shape, stat_shape),
        scratch_shapes=[col_scratch],
        compiler_params=params,
    )(x, w1p)

    # pass 2: bn1 + relu + conv2 + per-image BN2 partial stats
    h2, s2, q2 = pl.pallas_call(
        functools.partial(_bn_relu_conv2_kernel, inv_m=inv_m, compute_dtype=cd),
        grid=(N,),
        in_specs=[img_spec, stat_in_spec, stat_in_spec, vec_spec, vec_spec, w_spec],
        out_specs=(img_spec, stat_out_spec, stat_out_spec),
        out_shape=(act_shape, stat_shape, stat_shape),
        scratch_shapes=[col_scratch],
        compiler_params=params,
    )(h1, s1, q1, g1p, b1p, w2p)

    # pass 3: bn2 + residual add + relu
    out = pl.pallas_call(
        functools.partial(_bn_residual_kernel, inv_m=inv_m),
        grid=(N,),
        in_specs=[img_spec, stat_in_spec, stat_in_spec, vec_spec, vec_spec, img_spec],
        out_specs=img_spec,
        out_shape=jax.ShapeDtypeStruct((N, H, W, C), x.dtype),
        compiler_params=params,
    )(h2, s2, q2, g2p, b2p, x)

    return jnp.transpose(out, (0, 3, 1, 2))                  # -> NCHW


def reference_basic_block(x_nchw, w1, g1, b1, w2, g2, b2):
    # Pure-JAX reference (NHWC convs + training-mode BN) for correctness check.
    x = jnp.transpose(x_nchw, (0, 2, 3, 1)).astype(jnp.float32)

    def conv(h, w):
        return lax.conv_general_dilated(
            h, w, window_strides=(1, 1), padding="SAME",
            dimension_numbers=("NHWC", "HWIO", "NHWC"))

    def bn(h, g, b):
        mean = jnp.mean(h, axis=(0, 1, 2), keepdims=True)
        var = jnp.mean((h - mean) ** 2, axis=(0, 1, 2), keepdims=True)
        return (h - mean) * lax.rsqrt(var + EPS) * g + b

    h = jax.nn.relu(bn(conv(x, w1), g1, b1))
    h = bn(conv(h, w2), g2, b2)
    out = jax.nn.relu(h + x)
    return jnp.transpose(out, (0, 3, 1, 2))


if __name__ == "__main__":
    # Small shapes: inplanes = planes = 4, stride = 1, downsample = None.
    N, C, H, W = 2, 4, 16, 16
    key = jax.random.PRNGKey(0)
    kx, kw1, kw2 = jax.random.split(key, 3)

    x = jax.random.normal(kx, (N, C, H, W), dtype=jnp.float32)

    # Deterministic conv weight init (kaiming-uniform-like bound = 1/sqrt(fan_in)).
    fan_in = C * 3 * 3
    bound = 1.0 / (fan_in ** 0.5)
    w1 = jax.random.uniform(kw1, (3, 3, C, C), jnp.float32, -bound, bound)
    w2 = jax.random.uniform(kw2, (3, 3, C, C), jnp.float32, -bound, bound)

    # BatchNorm2d default init: weight = 1, bias = 0.
    g1 = jnp.ones((C,), jnp.float32)
    b1 = jnp.zeros((C,), jnp.float32)
    g2 = jnp.ones((C,), jnp.float32)
    b2 = jnp.zeros((C,), jnp.float32)

    ref = reference_basic_block(x, w1, g1, b1, w2, g2, b2)

    # f32 path: strict check against the f32 reference.
    out = jax.block_until_ready(basic_block(x, w1, g1, b1, w2, g2, b2))
    assert out.shape == (N, C, H, W), out.shape
    assert jnp.allclose(out, ref, atol=1e-3, rtol=1e-3), float(
        jnp.max(jnp.abs(out - ref)))

    # bf16 perf path (bf16 MXU operands, bf16 slab + HBM intermediates, f32
    # stats/elementwise): looser tolerance vs the f32 reference.
    out_bf16 = jax.block_until_ready(
        basic_block(x, w1, g1, b1, w2, g2, b2, compute_dtype=jnp.bfloat16))
    assert jnp.allclose(out_bf16, ref, atol=5e-2, rtol=5e-2), float(
        jnp.max(jnp.abs(out_bf16 - ref)))

    print("KERNEL_OK")
</pallas_src>

<mosaic_0001>
module attributes {stable_mosaic.version = 11 : i64} {
  func.func @_conv1_kernel(%arg0: i32, %arg1: memref<1x16x16x4xf32, #tpu.memory_space<vmem>>, %arg2: memref<3x12x4xf32, #tpu.memory_space<vmem>>, %arg3: memref<1x16x16x4xf32, #tpu.memory_space<vmem>>, %arg4: memref<1x1x4xf32, #tpu.memory_space<vmem>>, %arg5: memref<1x1x4xf32, #tpu.memory_space<vmem>>, %arg6: memref<18x16x12xf32, #tpu.memory_space<vmem>>) attributes {dimension_semantics = [#tpu.dimension_semantics<parallel>], iteration_bounds = array<i64: 2>, scalar_prefetch = 0 : i64, scratch_operands = 1 : i64, tpu.core_type = #tpu.core_type<tc>, window_params = [{transform_indices = @transform_0, window_bounds = array<i64: 1, 16, 16, 4>}, {pipeline_mode = #tpu.pipeline_mode<synchronous>, transform_indices = @transform_1, window_bounds = array<i64: 3, 12, 4>}, {transform_indices = @transform_2, window_bounds = array<i64: 1, 16, 16, 4>}, {transform_indices = @transform_3, window_bounds = array<i64: 1, 1, 4>}, {transform_indices = @transform_4, window_bounds = array<i64: 1, 1, 4>}]} {
    %c0 = arith.constant 0 : index
    %c0_0 = arith.constant 0 : index
    %c0_1 = arith.constant 0 : index
    %c0_2 = arith.constant 0 : index
    %0 = vector.load %arg1[%c0, %c0_0, %c0_1, %c0_2] : memref<1x16x16x4xf32, #tpu.memory_space<vmem>>, vector<1x16x16x4xf32>
    %1 = vector.shape_cast %0 : vector<1x16x16x4xf32> to vector<16x16x4xf32>
    %cst = arith.constant 0.000000e+00 : f32
    %2 = vector.broadcast %cst : f32 to vector<1x16x12xf32>
    %cst_3 = arith.constant 0.000000e+00 : f32
    %3 = vector.broadcast %cst_3 : f32 to vector<16x1x4xf32>
    %c0_4 = arith.constant 0 : index
    %c0_5 = arith.constant 0 : index
    %c0_6 = arith.constant 0 : index
    %4 = vector.load %arg6[%c0_4, %c0_5, %c0_6] : memref<18x16x12xf32, #tpu.memory_space<vmem>>, vector<1x16x12xf32>
    tpu.vector_store %arg6[%c0_4, %c0_5, %c0_6], %2 {strides = array<i32>} : memref<18x16x12xf32, #tpu.memory_space<vmem>>, vector<1x16x12xf32>,
    %c17 = arith.constant 17 : index
    %c0_7 = arith.constant 0 : index
    %c0_8 = arith.constant 0 : index
    %5 = vector.load %arg6[%c17, %c0_7, %c0_8] : memref<18x16x12xf32, #tpu.memory_space<vmem>>, vector<1x16x12xf32>
    tpu.vector_store %arg6[%c17, %c0_7, %c0_8], %2 {strides = array<i32>} : memref<18x16x12xf32, #tpu.memory_space<vmem>>, vector<1x16x12xf32>,
    %6 = vector.extract_strided_slice %1 {offsets = [0, 0, 0], sizes = [16, 15, 4], strides = [1, 1, 1]} : vector<16x16x4xf32> to vector<16x15x4xf32>
    %7 = tpu.concatenate %3, %6 in 1 : vector<16x1x4xf32>, vector<16x15x4xf32> -> vector<16x16x4xf32>
    %c1 = arith.constant 1 : index
    %c0_9 = arith.constant 0 : index
    %c0_10 = arith.constant 0 : index
    %8 = vector.load %arg6[%c1, %c0_9, %c0_10] : memref<18x16x12xf32, #tpu.memory_space<vmem>>, vector<16x16x4xf32>
    tpu.vector_store %arg6[%c1, %c0_9, %c0_10], %7 {strides = array<i32>} : memref<18x16x12xf32, #tpu.memory_space<vmem>>, vector<16x16x4xf32>,
    %c1_11 = arith.constant 1 : index
    %c0_12 = arith.constant 0 : index
    %c4 = arith.constant 4 : index
    %9 = vector.load %arg6[%c1_11, %c0_12, %c4] : memref<18x16x12xf32, #tpu.memory_space<vmem>>, vector<16x16x4xf32>
    tpu.vector_store %arg6[%c1_11, %c0_12, %c4], %1 {strides = array<i32>} : memref<18x16x12xf32, #tpu.memory_space<vmem>>, vector<16x16x4xf32>,
    %10 = vector.extract_strided_slice %1 {offsets = [0, 1, 0], sizes = [16, 15, 4], strides = [1, 1, 1]} : vector<16x16x4xf32> to vector<16x15x4xf32>
    %11 = tpu.concatenate %10, %3 in 1 : vector<16x15x4xf32>, vector<16x1x4xf32> -> vector<16x16x4xf32>
    %c1_13 = arith.constant 1 : index
    %c0_14 = arith.constant 0 : index
    %c8 = arith.constant 8 : index
    %12 = vector.load %arg6[%c1_13, %c0_14, %c8] : memref<18x16x12xf32, #tpu.memory_space<vmem>>, vector<16x16x4xf32>
    tpu.vector_store %arg6[%c1_13, %c0_14, %c8], %11 {strides = array<i32>} : memref<18x16x12xf32, #tpu.memory_space<vmem>>, vector<16x16x4xf32>,
    %cst_15 = arith.constant 0.000000e+00 : f32
    %13 = vector.broadcast %cst_15 : f32 to vector<256x4xf32>
    %c0_16 = arith.constant 0 : index
    %c0_17 = arith.constant 0 : index
    %c0_18 = arith.constant 0 : index
    %14 = vector.load %arg6[%c0_16, %c0_17, %c0_18] : memref<18x16x12xf32, #tpu.memory_space<vmem>>, vector<16x16x12xf32>
    %15 = vector.shape_cast %14 : vector<16x16x12xf32> to vector<256x12xf32>
    %c0_19 = arith.constant 0 : index
    %c0_20 = arith.constant 0 : index
    %c0_21 = arith.constant 0 : index
    %16 = vector.load %arg2[%c0_19, %c0_20, %c0_21] : memref<3x12x4xf32, #tpu.memory_space<vmem>>, vector<1x12x4xf32>
    %17 = vector.shape_cast %16 : vector<1x12x4xf32> to vector<12x4xf32>
    %cst_22 = arith.constant dense<0.000000e+00> : vector<256x4xf32>
    %18 = tpu.matmul %15, %17, %cst_22 {dimension_numbers = #tpu.dot_dimension_numbers<[1], [0], [0], [1], [0, 0, 1, 1], [], []>} : vector<256x12xf32>, vector<12x4xf32>, vector<256x4xf32> -> vector<256x4xf32>
    %19 = arith.addf %13, %18 : vector<256x4xf32>
    %c1_23 = arith.constant 1 : index
    %c0_24 = arith.constant 0 : index
    %c0_25 = arith.constant 0 : index
    %20 = vector.load %arg6[%c1_23, %c0_24, %c0_25] : memref<18x16x12xf32, #tpu.memory_space<vmem>>, vector<16x16x12xf32>
    %21 = vector.shape_cast %20 : vector<16x16x12xf32> to vector<256x12xf32>
    %c1_26 = arith.constant 1 : index
    %c0_27 = arith.constant 0 : index
    %c0_28 = arith.constant 0 : index
    %22 = vector.load %arg2[%c1_26, %c0_27, %c0_28] : memref<3x12x4xf32, #tpu.memory_space<vmem>>, vector<1x12x4xf32>
    %23 = vector.shape_cast %22 : vector<1x12x4xf32> to vector<12x4xf32>
    %cst_29 = arith.constant dense<0.000000e+00> : vector<256x4xf32>
    %24 = tpu.matmul %21, %23, %cst_29 {dimension_numbers = #tpu.dot_dimension_numbers<[1], [0], [0], [1], [0, 0, 1, 1], [], []>} : vector<256x12xf32>, vector<12x4xf32>, vector<256x4xf32> -> vector<256x4xf32>
    %25 = arith.addf %19, %24 : vector<256x4xf32>
    %c2 = arith.constant 2 : index
    %c0_30 = arith.constant 0 : index
    %c0_31 = arith.constant 0 : index
    %26 = vector.load %arg6[%c2, %c0_30, %c0_31] : memref<18x16x12xf32, #tpu.memory_space<vmem>>, vector<16x16x12xf32>
    %27 = vector.shape_cast %26 : vector<16x16x12xf32> to vector<256x12xf32>
    %c2_32 = arith.constant 2 : index
    %c0_33 = arith.constant 0 : index
    %c0_34 = arith.constant 0 : index
    %28 = vector.load %arg2[%c2_32, %c0_33, %c0_34] : memref<3x12x4xf32, #tpu.memory_space<vmem>>, vector<1x12x4xf32>
    %29 = vector.shape_cast %28 : vector<1x12x4xf32> to vector<12x4xf32>
    %cst_35 = arith.constant dense<0.000000e+00> : vector<256x4xf32>
    %30 = tpu.matmul %27, %29, %cst_35 {dimension_numbers = #tpu.dot_dimension_numbers<[1], [0], [0], [1], [0, 0, 1, 1], [], []>} : vector<256x12xf32>, vector<12x4xf32>, vector<256x4xf32> -> vector<256x4xf32>
    %31 = arith.addf %25, %30 : vector<256x4xf32>
    %32 = vector.shape_cast %31 : vector<256x4xf32> to vector<1x16x16x4xf32>
    %c0_36 = arith.constant 0 : index
    %c0_37 = arith.constant 0 : index
    %c0_38 = arith.constant 0 : index
    %c0_39 = arith.constant 0 : index
    %33 = vector.load %arg3[%c0_36, %c0_37, %c0_38, %c0_39] : memref<1x16x16x4xf32, #tpu.memory_space<vmem>>, vector<1x16x16x4xf32>
    tpu.vector_store %arg3[%c0_36, %c0_37, %c0_38, %c0_39], %32 {strides = array<i32>} : memref<1x16x16x4xf32, #tpu.memory_space<vmem>>, vector<1x16x16x4xf32>,
    %cst_40 = arith.constant dense<0.000000e+00> : vector<4xf32>
    %34 = vector.multi_reduction <add>, %31, %cst_40 [0] : vector<256x4xf32> to vector<4xf32>
    %35 = vector.shape_cast %34 : vector<4xf32> to vector<1x1x4xf32>
    %c0_41 = arith.constant 0 : index
    %c0_42 = arith.constant 0 : index
    %c0_43 = arith.constant 0 : index
    %36 = vector.load %arg4[%c0_41, %c0_42, %c0_43] : memref<1x1x4xf32, #tpu.memory_space<vmem>>, vector<1x1x4xf32>
    tpu.vector_store %arg4[%c0_41, %c0_42, %c0_43], %35 {strides = array<i32>} : memref<1x1x4xf32, #tpu.memory_space<vmem>>, vector<1x1x4xf32>,
    %37 = arith.mulf %31, %31 : vector<256x4xf32>
    %cst_44 = arith.constant dense<0.000000e+00> : vector<4xf32>
    %38 = vector.multi_reduction <add>, %37, %cst_44 [0] : vector<256x4xf32> to vector<4xf32>
    %39 = vector.shape_cast %38 : vector<4xf32> to vector<1x1x4xf32>
    %c0_45 = arith.constant 0 : index
    %c0_46 = arith.constant 0 : index
    %c0_47 = arith.constant 0 : index
    %40 = vector.load %arg5[%c0_45, %c0_46, %c0_47] : memref<1x1x4xf32, #tpu.memory_space<vmem>>, vector<1x1x4xf32>
    tpu.vector_store %arg5[%c0_45, %c0_46, %c0_47], %39 {strides = array<i32>} : memref<1x1x4xf32, #tpu.memory_space<vmem>>, vector<1x1x4xf32>,
    return
  }
  func.func @transform_0(%arg0: i32) -> (i32, i32, i32, i32) {
    %c0_i32 = arith.constant 0 : i32
    %c0_i32_0 = arith.constant 0 : i32
    %c0_i32_1 = arith.constant 0 : i32
    %c0_i32_2 = arith.constant 0 : i32
    return %arg0, %c0_i32, %c0_i32_0, %c0_i32_1 : i32, i32, i32, i32
  }
  func.func @transform_1(%arg0: i32) -> (i32, i32, i32) {
    %c0_i32 = arith.constant 0 : i32
    %c0_i32_0 = arith.constant 0 : i32
    %c0_i32_1 = arith.constant 0 : i32
    %c0_i32_2 = arith.constant 0 : i32
    return %c0_i32, %c0_i32_0, %c0_i32_1 : i32, i32, i32
  }
  func.func @transform_2(%arg0: i32) -> (i32, i32, i32, i32) {
    %c0_i32 = arith.constant 0 : i32
    %c0_i32_0 = arith.constant 0 : i32
    %c0_i32_1 = arith.constant 0 : i32
    %c0_i32_2 = arith.constant 0 : i32
    return %arg0, %c0_i32, %c0_i32_0, %c0_i32_1 : i32, i32, i32, i32
  }
  func.func @transform_3(%arg0: i32) -> (i32, i32, i32) {
    %c0_i32 = arith.constant 0 : i32
    %c0_i32_0 = arith.constant 0 : i32
    %c0_i32_1 = arith.constant 0 : i32
    return %arg0, %c0_i32, %c0_i32_0 : i32, i32, i32
  }
  func.func @transform_4(%arg0: i32) -> (i32, i32, i32) {
    %c0_i32 = arith.constant 0 : i32
    %c0_i32_0 = arith.constant 0 : i32
    %c0_i32_1 = arith.constant 0 : i32
    return %arg0, %c0_i32, %c0_i32_0 : i32, i32, i32
  }
}

</mosaic_0001>

<llo_original>
// kernel: tpu_custom_call.1
$region0: #{tpu_custom_call.1}
  #allocation0 [shape = 'u32[]', space=smem, size = 0x4, offset = 0x4, fixed_abs, tag = 'smem constant byte address 0x4 - core index']
  #allocation1 [shape = 'u32[144,128]{1,0:T(1,128)}', space=vmem, size = 0x12000, scoped, tag = 'internal scratch']
  #allocation2 [shape = 'f32[18,16,12]{2,1,0:T(8,128)}', space=vmem, size = 0x24000, scoped, tag = 'scratch operand']
  %s0 = inlined_call_operand.vmem [shape: f32[2,16,16,4], index: 0, kind: input, shape index: {}]
  %s1 = inlined_call_operand.vmem [shape: f32[3,12,4], index: 1, kind: input, shape index: {}]
  %s2 = inlined_call_operand.vmem [shape: f32[2,16,16,4], index: 2, kind: output, shape index: {0}]
  %s3 = inlined_call_operand.hbm [shape: f32[2,1,4], index: 3, kind: output, shape index: {1}]
  %s4 = inlined_call_operand.hbm [shape: f32[2,1,4], index: 4, kind: output, shape index: {2}]
  %5 = xla_tuple %s2, %s3, %s4
  %s6 = sld [smem:[#allocation0]]
  $region57: #{tpu_custom_call.1} parent=0
    _
  %s8 = ssub.s32 1, %s6
  %s9 = scalar_select 0, %s8, %s6
  $region1: #{tpu_custom_call.1} parent=0
    #allocation3 [shape = 'u8[1024]{0}', space=vmem, size = 0x400, scoped, tag = 'output window, operand 1']
    #allocation4 [shape = 's32[2]{0}', space=sflag, size = 0x8, scoped, tag = 'scoped memory for tpu_custom_call.1']
    #allocation5 [shape = 'u8[1024]{0}', space=vmem, size = 0x400, scoped, tag = 'output window, operand 2']
    #allocation6 [shape = 's32[2]{0}', space=sflag, size = 0x8, scoped, tag = 'scoped memory for tpu_custom_call.1']
    %10 = vsyncpa [#allocation4], 0
    %s11 = scalar_lea.sflag [#allocation4], 1
    %12 = vsyncpa %s11, 0
    %13 = vsyncpa [#allocation6], 0
    %s14 = scalar_lea.sflag [#allocation6], 1
    %15 = vsyncpa %s14, 0
    loop: start=0, step=1, limit=4
    $region2: #{tpu_custom_call.1} parent=1 // loop_pre_header
      _
    $region3: #{tpu_custom_call.1} parent=1 // loop_header
      %s17 = sphi 0, %s21
      %p18 = scmp.ge.s32.totalorder %s17, 4
      %s27 = sphi 0, %s29
      %s30 = sphi 0, %s27
      %s31 = sphi 0, %s30
      %s47 = sphi 0, %s31
      %s51 = sphi 0, %s51
      %s53 = sphi 0, %s51
      %s54 = sphi 0, %s53
      %s68 = sphi 0, %s54
      %s74 = sphi 0, %s76
      %s77 = sphi 0, %s74
      %s78 = sphi 0, %s77
      %s94 = sphi 0, %s78
      %s100 = sphi 0, %s102
      %s103 = sphi 0, %s100
      %s104 = sphi 0, %s103
      %s120 = sphi 0, %s104
      %s126 = sphi 0, %s128
      %s129 = sphi 0, %s126
      %s130 = sphi 0, %s129
      %s146 = sphi 0, %s130
    $region4: #{tpu_custom_call.1} parent=1 // loop_header_branch
      %20 = sbr.rel (%p18) target = $region8
    $region5: #{tpu_custom_call.1} parent=1 // loop_body
      %s22 = ssub.s32 %s17, 1
      %s23 = ssub.s32 %s17, 2
      %s24 = sadd.s32 %s17, 1
      %s25 = ssub.s32 %s17, %s24
      %p26 = scmp.eq.s32.totalorder %s25, 0
      %s28 = sadd.s32 %s27, 1
      %s29 = scalar_select %p26, %s27, %s28
      %p32 = pneg %p26
      %p33 = scmp.eq.s32.totalorder %s17, 1
      %p34 = por %p32, %p33
      %p35 = scmp.ne.s32.totalorder %s27, %s30
      %p36 = scmp.eq.s32.totalorder %s17, 0
      %p37 = por %p35, %p36
      %p38 = scmp.ne.s32.totalorder %s27, %s30
      %p39 = scmp.eq.s32.totalorder %s22, 1
      %p40 = por %p38, %p39
      %p41 = scmp.ne.s32.totalorder %s30, %s31
      %p42 = scmp.eq.s32.totalorder %s22, 0
      %p43 = por %p41, %p42
      %p44 = scmp.ne.s32.totalorder %s30, %s31
      %p45 = scmp.eq.s32.totalorder %s23, 1
      %p46 = por %p44, %p45
      %p48 = scmp.ne.s32.totalorder %s31, %s47
      %p49 = scmp.eq.s32.totalorder %s23, 0
      %p50 = por %p48, %p49
      %s52 = sadd.s32 %s51, 1
      %p55 = scmp.eq.s32.totalorder %s17, 1
      %p56 = scmp.ne.s32.totalorder %s51, %s53
      %p57 = scmp.eq.s32.totalorder %s17, 0
      %p58 = por %p56, %p57
      %p59 = scmp.ne.s32.totalorder %s51, %s53
      %p60 = scmp.eq.s32.totalorder %s22, 1
      %p61 = por %p59, %p60
      %p62 = scmp.ne.s32.totalorder %s53, %s54
      %p63 = scmp.eq.s32.totalorder %s22, 0
      %p64 = por %p62, %p63
      %p65 = scmp.ne.s32.totalorder %s53, %s54
      %p66 = scmp.eq.s32.totalorder %s23, 1
      %p67 = por %p65, %p66
      %p69 = scmp.ne.s32.totalorder %s54, %s68
      %p70 = scmp.eq.s32.totalorder %s23, 0
      %p71 = por %p69, %p70
      %s72 = ssub.s32 %s17, %s24
      %p73 = scmp.eq.s32.totalorder %s72, 0
      %s75 = sadd.s32 %s74, 1
      %s76 = scalar_select %p73, %s74, %s75
      %p79 = pneg %p73
      %p80 = scmp.eq.s32.totalorder %s17, 1
      %p81 = por %p79, %p80
      %p82 = scmp.ne.s32.totalorder %s74, %s77
      %p83 = scmp.eq.s32.totalorder %s17, 0
      %p84 = por %p82, %p83
      %p85 = scmp.ne.s32.totalorder %s74, %s77
      %p86 = scmp.eq.s32.totalorder %s22, 1
      %p87 = por %p85, %p86
      %p88 = scmp.ne.s32.totalorder %s77, %s78
      %p89 = scmp.eq.s32.totalorder %s22, 0
      %p90 = por %p88, %p89
      %p91 = scmp.ne.s32.totalorder %s77, %s78
      %p92 = scmp.eq.s32.totalorder %s23, 1
      %p93 = por %p91, %p92
      %p95 = scmp.ne.s32.totalorder %s78, %s94
      %p96 = scmp.eq.s32.totalorder %s23, 0
      %p97 = por %p95, %p96
      %s98 = ssub.s32 %s17, %s24
      %p99 = scmp.eq.s32.totalorder %s98, 0
      %s101 = sadd.s32 %s100, 1
      %s102 = scalar_select %p99, %s100, %s101
      %p105 = pneg %p99
      %p106 = scmp.eq.s32.totalorder %s17, 1
      %p107 = por %p105, %p106
      %p108 = scmp.ne.s32.totalorder %s100, %s103
      %p109 = scmp.eq.s32.totalorder %s17, 0
      %p110 = por %p108, %p109
      %p111 = scmp.ne.s32.totalorder %s100, %s103
      %p112 = scmp.eq.s32.totalorder %s22, 1
      %p113 = por %p111, %p112
      %p114 = scmp.ne.s32.totalorder %s103, %s104
      %p115 = scmp.eq.s32.totalorder %s22, 0
      %p116 = por %p114, %p115
      %p117 = scmp.ne.s32.totalorder %s103, %s104
      %p118 = scmp.eq.s32.totalorder %s23, 1
      %p119 = por %p117, %p118
      %p121 = scmp.ne.s32.totalorder %s104, %s120
      %p122 = scmp.eq.s32.totalorder %s23, 0
      %p123 = por %p121, %p122
      %s124 = ssub.s32 %s17, %s24
      %p125 = scmp.eq.s32.totalorder %s124, 0
      %s127 = sadd.s32 %s126, 1
      %s128 = scalar_select %p125, %s126, %s127
      %p131 = pneg %p125
      %p132 = scmp.eq.s32.totalorder %s17, 1
      %p133 = por %p131, %p132
      %p134 = scmp.ne.s32.totalorder %s126, %s129
      %p135 = scmp.eq.s32.totalorder %s17, 0
      %p136 = por %p134, %p135
      %p137 = scmp.ne.s32.totalorder %s126, %s129
      %p138 = scmp.eq.s32.totalorder %s22, 1
      %p139 = por %p137, %p138
      %p140 = scmp.ne.s32.totalorder %s129, %s130
      %p141 = scmp.eq.s32.totalorder %s22, 0
      %p142 = por %p140, %p141
      %p143 = scmp.ne.s32.totalorder %s129, %s130
      %p144 = scmp.eq.s32.totalorder %s23, 1
      %p145 = por %p143, %p144
      %p147 = scmp.ne.s32.totalorder %s130, %s146
      %p148 = scmp.eq.s32.totalorder %s23, 0
      %p149 = por %p147, %p148
      %p150 = scmp.le.s32.totalorder 1, %s17
      %p151 = scmp.lt.s32.totalorder %s17, 3
      %p152 = pnand %p150, %p151
      %p153 = pneg %p152
      // Predicated region
      $region9: #{tpu_custom_call.1} parent=5 // pred_check
        _
      $region10: #{tpu_custom_call.1} parent=5 // pred_check_branch
        %155 = sbr.rel (%p152) target = $region12
      $region11: #{tpu_custom_call.1} parent=5 // pred_region
        %s156 = ssub.s32 %s17, 1
        // Predicated region
        $region13: #{tpu_custom_call.1} parent=11 // pred_check
          %p157 = pneg %p64
        $region14: #{tpu_custom_call.1} parent=11 // pred_check_branch
          %159 = sbr.rel (%p157) target = $region16
        $region15: #{tpu_custom_call.1} parent=11 // pred_region
          _
        $region16: #{tpu_custom_call.1} parent=11 // pred_fallthru
          _
      $region12: #{tpu_custom_call.1} parent=5 // pred_fallthru
        _
      %p160 = scmp.lt.s32.totalorder %s17, 2
      // Predicated region
      $region17: #{tpu_custom_call.1} parent=5 // pred_check
        %p161 = pneg %p160
      $region18: #{tpu_custom_call.1} parent=5 // pred_check_branch
        %163 = sbr.rel (%p161) target = $region20
      $region19: #{tpu_custom_call.1} parent=5 // pred_region
        // Predicated region
        $region21: #{tpu_custom_call.1} parent=19 // pred_check
          %p164 = pneg %p37
        $region22: #{tpu_custom_call.1} parent=19 // pred_check_branch
          %166 = sbr.rel (%p164) target = $region24
        $region23: #{tpu_custom_call.1} parent=19 // pred_region
          %p167 = scmp.lt.s32.totalorder %s17, 1
          %s168 = scalar_select %p167, %s17, 1
          %s169 = smul.addr %s168, 32
          %s170 = smul.addr %s169, 8
          %s171 = scalar_lea.vmem %s0, %s170
        $region24: #{tpu_custom_call.1} parent=19 // pred_fallthru
          _
      $region20: #{tpu_custom_call.1} parent=5 // pred_fallthru
        _
      %p172 = scmp.le.s32.totalorder 1, %s17
      %p173 = scmp.lt.s32.totalorder %s17, 3
      %p174 = pnand %p172, %p173
      %p175 = pneg %p174
      // Predicated region
      $region25: #{tpu_custom_call.1} parent=5 // pred_check
        _
      $region26: #{tpu_custom_call.1} parent=5 // pred_check_branch
        %177 = sbr.rel (%p174) target = $region28
      $region27: #{tpu_custom_call.1} parent=5 // pred_region
        %s178 = ssub.s32 %s17, 1
        %p179 = scmp.lt.s32.totalorder %s22, 1
        %s180 = scalar_select %p179, %s22, 1
        %s181 = smul.addr %s180, 32
        %s182 = smul.addr %s181, 8
        %s183 = scalar_lea.vmem %s0, %s182
        %p184 = pneg %p43
        %p185 = pneg %p40
        %p186 = pneg %p64
        %p187 = pneg %p61
        %p188 = pneg %p90
        %p189 = pneg %p87
        %p190 = scmp.lt.s32.totalorder %s22, 1
        %s191 = scalar_select %p190, %s22, 1
        %s192 = smul.addr %s191, 32
        %s193 = smul.addr %s192, 8
        %s194 = scalar_lea.vmem %s2, %s193
        %p195 = pneg %p116
        %p196 = pneg %p113
        %s197 = sand.u32 %s103, 1
        %s198 = scalar_lea.sflag [#allocation4], %s197
        %s199 = sand.u32 %s103, 1
        %s200 = scalar_lea.vmem [#allocation3], %s199
        %p201 = pneg %p142
        %p202 = pneg %p139
        %s203 = sand.u32 %s129, 1
        %s204 = scalar_lea.sflag [#allocation6], %s203
        %s205 = sand.u32 %s129, 1
        %s206 = scalar_lea.vmem [#allocation5], %s205
        %p207 = scmp.lt.s32.totalorder %s22, 1
        %s208 = scalar_select %p207, %s22, 1
        %s209 = smul.addr %s208, 32
        %s210 = smul.addr %s209, 8
        %s211 = scalar_lea.vmem %s0, %s210
        %p212 = scmp.lt.s32.totalorder %s22, 1
        %s213 = scalar_select %p212, %s22, 1
        %s214 = smul.addr %s213, 32
        %s215 = smul.addr %s214, 8
        %s216 = scalar_lea.vmem %s2, %s215
        %v217 = vld [vmem:[%s211] sm:$0xff]
        %v218 = vld [vmem:[%s211 + $0x8] sm:$0xff]
        %v219 = vld [vmem:[%s211 + $0x10] sm:$0xff]
        %v220 = vld [vmem:[%s211 + $0x18] sm:$0xff]
        %v221 = vld [vmem:[%s211 + $0x20] sm:$0xff]
        %v222 = vld [vmem:[%s211 + $0x28] sm:$0xff]
        %v223 = vld [vmem:[%s211 + $0x30] sm:$0xff]
        %v224 = vld [vmem:[%s211 + $0x38] sm:$0xff]
        %v225 = vld [vmem:[%s211 + $0x40] sm:$0xff]
        %v226 = vld [vmem:[%s211 + $0x48] sm:$0xff]
        %v227 = vld [vmem:[%s211 + $0x50] sm:$0xff]
        %v228 = vld [vmem:[%s211 + $0x58] sm:$0xff]
        %v229 = vld [vmem:[%s211 + $0x60] sm:$0xff]
        %v230 = vld [vmem:[%s211 + $0x68] sm:$0xff]
        %v231 = vld [vmem:[%s211 + $0x70] sm:$0xff]
        %v232 = vld [vmem:[%s211 + $0x78] sm:$0xff]
        %v233 = vld [vmem:[%s211 + $0x80] sm:$0xff]
        %v234 = vld [vmem:[%s211 + $0x88] sm:$0xff]
        %v235 = vld [vmem:[%s211 + $0x90] sm:$0xff]
        %v236 = vld [vmem:[%s211 + $0x98] sm:$0xff]
        %v237 = vld [vmem:[%s211 + $0xa0] sm:$0xff]
        %v238 = vld [vmem:[%s211 + $0xa8] sm:$0xff]
        %v239 = vld [vmem:[%s211 + $0xb0] sm:$0xff]
        %v240 = vld [vmem:[%s211 + $0xb8] sm:$0xff]
        %v241 = vld [vmem:[%s211 + $0xc0] sm:$0xff]
        %v242 = vld [vmem:[%s211 + $0xc8] sm:$0xff]
        %v243 = vld [vmem:[%s211 + $0xd0] sm:$0xff]
        %v244 = vld [vmem:[%s211 + $0xd8] sm:$0xff]
        %v245 = vld [vmem:[%s211 + $0xe0] sm:$0xff]
        %v246 = vld [vmem:[%s211 + $0xe8] sm:$0xff]
        %v247 = vld [vmem:[%s211 + $0xf0] sm:$0xff]
        %v248 = vld [vmem:[%s211 + $0xf8] sm:$0xff]
        %vm249 = vcmask 97280
        %250 = vst.msk [vmem:[#allocation2] sm:$0xff] %vm249, 0.0
        %251 = vst.msk [vmem:[#allocation2 + $0x8] sm:$0xff] %vm249, 0.0
        %s252 = scalar_lea.vmem [#allocation2], 272
        %253 = vst.msk [vmem:[%s252] sm:$0xff] %vm249, 0.0
        %254 = vst.msk [vmem:[%s252 + $0x8] sm:$0xff] %vm249, 0.0
        %vm287 = vcmask 1040384
        %v288 = vrot.slane %v217, 7
        %v289 = vrot.slane %v218, 7
        %v290 = vsel %vm287, %v288, %v289
        %v291 = vrot.slane %v219, 7
        %v292 = vrot.slane %v220, 7
        %v293 = vsel %vm287, %v291, %v292
        %v294 = vrot.slane %v221, 7
        %v295 = vrot.slane %v222, 7
        %v296 = vsel %vm287, %v294, %v295
        %v297 = vrot.slane %v223, 7
        %v298 = vrot.slane %v224, 7
        %v299 = vsel %vm287, %v297, %v298
        %v300 = vrot.slane %v225, 7
        %v301 = vrot.slane %v226, 7
        %v302 = vsel %vm287, %v300, %v301
        %v303 = vrot.slane %v227, 7
        %v304 = vrot.slane %v228, 7
        %v305 = vsel %vm287, %v303, %v304
        %v306 = vrot.slane %v229, 7
        %v307 = vrot.slane %v230, 7
        %v308 = vsel %vm287, %v306, %v307
        %v309 = vrot.slane %v231, 7
        %v310 = vrot.slane %v232, 7
        %v311 = vsel %vm287, %v309, %v310
        %v312 = vrot.slane %v233, 7
        %v313 = vrot.slane %v234, 7
        %v314 = vsel %vm287, %v312, %v313
        %v315 = vrot.slane %v235, 7
        %v316 = vrot.slane %v236, 7
        %v317 = vsel %vm287, %v315, %v316
        %v318 = vrot.slane %v237, 7
        %v319 = vrot.slane %v238, 7
        %v320 = vsel %vm287, %v318, %v319
        %v321 = vrot.slane %v239, 7
        %v322 = vrot.slane %v240, 7
        %v323 = vsel %vm287, %v321, %v322
        %v324 = vrot.slane %v241, 7
        %v325 = vrot.slane %v242, 7
        %v326 = vsel %vm287, %v324, %v325
        %v327 = vrot.slane %v243, 7
        %v328 = vrot.slane %v244, 7
        %v329 = vsel %vm287, %v327, %v328
        %v330 = vrot.slane %v245, 7
        %v331 = vrot.slane %v246, 7
        %v332 = vsel %vm287, %v330, %v331
        %v333 = vrot.slane %v247, 7
        %v334 = vrot.slane %v248, 7
        %v335 = vsel %vm287, %v333, %v334
        %v368 = vsel %vm287, 0.0, %v288
        %v369 = vsel %vm287, 0.0, %v291
        %v370 = vsel %vm287, 0.0, %v294
        %v371 = vsel %vm287, 0.0, %v297
        %v372 = vsel %vm287, 0.0, %v300
        %v373 = vsel %vm287, 0.0, %v303
        %v374 = vsel %vm287, 0.0, %v306
        %v375 = vsel %vm287, 0.0, %v309
        %v376 = vsel %vm287, 0.0, %v312
        %v377 = vsel %vm287, 0.0, %v315
        %v378 = vsel %vm287, 0.0, %v318
        %v379 = vsel %vm287, 0.0, %v321
        %v380 = vsel %vm287, 0.0, %v324
        %v381 = vsel %vm287, 0.0, %v327
        %v382 = vsel %vm287, 0.0, %v330
        %v383 = vsel %vm287, 0.0, %v333
        %s384 = scalar_lea.vmem [#allocation2], 16
        %vm385 = vcmask 31744
        %386 = vst.msk [vmem:[%s384] sm:$0xff] %vm385, %v368
        %387 = vst.msk [vmem:[%s384 + $0x8] sm:$0xff] %vm385, %v290
        %388 = vst.msk [vmem:[%s384 + $0x10] sm:$0xff] %vm385, %v369
        %389 = vst.msk [vmem:[%s384 + $0x18] sm:$0xff] %vm385, %v293
        %390 = vst.msk [vmem:[%s384 + $0x20] sm:$0xff] %vm385, %v370
        %391 = vst.msk [vmem:[%s384 + $0x28] sm:$0xff] %vm385, %v296
        %392 = vst.msk [vmem:[%s384 + $0x30] sm:$0xff] %vm385, %v371
        %393 = vst.msk [vmem:[%s384 + $0x38] sm:$0xff] %vm385, %v299
        %394 = vst.msk [vmem:[%s384 + $0x40] sm:$0xff] %vm385, %v372
        %395 = vst.msk [vmem:[%s384 + $0x48] sm:$0xff] %vm385, %v302
        %396 = vst.msk [vmem:[%s384 + $0x50] sm:$0xff] %vm385, %v373
        %397 = vst.msk [vmem:[%s384 + $0x58] sm:$0xff] %vm385, %v305
        %398 = vst.msk [vmem:[%s384 + $0x60] sm:$0xff] %vm385, %v374
        %399 = vst.msk [vmem:[%s384 + $0x68] sm:$0xff] %vm385, %v308
        %400 = vst.msk [vmem:[%s384 + $0x70] sm:$0xff] %vm385, %v375
        %401 = vst.msk [vmem:[%s384 + $0x78] sm:$0xff] %vm385, %v311
        %402 = vst.msk [vmem:[%s384 + $0x80] sm:$0xff] %vm385, %v376
        %403 = vst.msk [vmem:[%s384 + $0x88] sm:$0xff] %vm385, %v314
        %404 = vst.msk [vmem:[%s384 + $0x90] sm:$0xff] %vm385, %v377
        %405 = vst.msk [vmem:[%s384 + $0x98] sm:$0xff] %vm385, %v317
        %406 = vst.msk [vmem:[%s384 + $0xa0] sm:$0xff] %vm385, %v378
        %407 = vst.msk [vmem:[%s384 + $0xa8] sm:$0xff] %vm385, %v320
        %408 = vst.msk [vmem:[%s384 + $0xb0] sm:$0xff] %vm385, %v379
        %409 = vst.msk [vmem:[%s384 + $0xb8] sm:$0xff] %vm385, %v323
        %410 = vst.msk [vmem:[%s384 + $0xc0] sm:$0xff] %vm385, %v380
        %411 = vst.msk [vmem:[%s384 + $0xc8] sm:$0xff] %vm385, %v326
        %412 = vst.msk [vmem:[%s384 + $0xd0] sm:$0xff] %vm385, %v381
        %413 = vst.msk [vmem:[%s384 + $0xd8] sm:$0xff] %vm385, %v329
        %414 = vst.msk [vmem:[%s384 + $0xe0] sm:$0xff] %vm385, %v382
        %415 = vst.msk [vmem:[%s384 + $0xe8] sm:$0xff] %vm385, %v332
        %416 = vst.msk [vmem:[%s384 + $0xf0] sm:$0xff] %vm385, %v383
        %417 = vst.msk [vmem:[%s384 + $0xf8] sm:$0xff] %vm385, %v335
        %418 = vrot.lane.b32.xlu0 %v217, 4
        %v419 = vpop.permute.xlu0 %418
        %420 = vrot.lane.b32.xlu0 %v218, 4
        %v421 = vpop.permute.xlu0 %420
        %422 = vrot.lane.b32.xlu0 %v219, 4
        %v423 = vpop.permute.xlu0 %422
        %424 = vrot.lane.b32.xlu0 %v220, 4
        %v425 = vpop.permute.xlu0 %424
        %426 = vrot.lane.b32.xlu0 %v221, 4
        %v427 = vpop.permute.xlu0 %426
        %428 = vrot.lane.b32.xlu0 %v222, 4
        %v429 = vpop.permute.xlu0 %428
        %430 = vrot.lane.b32.xlu0 %v223, 4
        %v431 = vpop.permute.xlu0 %430
        %432 = vrot.lane.b32.xlu0 %v224, 4
        %v433 = vpop.permute.xlu0 %432
        %434 = vrot.lane.b32.xlu0 %v225, 4
        %v435 = vpop.permute.xlu0 %434
        %436 = vrot.lane.b32.xlu0 %v226, 4
        %v437 = vpop.permute.xlu0 %436
        %438 = vrot.lane.b32.xlu0 %v227, 4
        %v439 = vpop.permute.xlu0 %438
        %440 = vrot.lane.b32.xlu0 %v228, 4
        %v441 = vpop.permute.xlu0 %440
        %442 = vrot.lane.b32.xlu0 %v229, 4
        %v443 = vpop.permute.xlu0 %442
        %444 = vrot.lane.b32.xlu0 %v230, 4
        %v445 = vpop.permute.xlu0 %444
        %446 = vrot.lane.b32.xlu0 %v231, 4
        %v447 = vpop.permute.xlu0 %446
        %448 = vrot.lane.b32.xlu0 %v232, 4
        %v449 = vpop.permute.xlu0 %448
        %450 = vrot.lane.b32.xlu0 %v233, 4
        %v451 = vpop.permute.xlu0 %450
        %452 = vrot.lane.b32.xlu0 %v234, 4
        %v453 = vpop.permute.xlu0 %452
        %454 = vrot.lane.b32.xlu0 %v235, 4
        %v455 = vpop.permute.xlu0 %454
        %456 = vrot.lane.b32.xlu0 %v236, 4
        %v457 = vpop.permute.xlu0 %456
        %458 = vrot.lane.b32.xlu0 %v237, 4
        %v459 = vpop.permute.xlu0 %458
        %460 = vrot.lane.b32.xlu0 %v238, 4
        %v461 = vpop.permute.xlu0 %460
        %462 = vrot.lane.b32.xlu0 %v239, 4
        %v463 = vpop.permute.xlu0 %462
        %464 = vrot.lane.b32.xlu0 %v240, 4
        %v465 = vpop.permute.xlu0 %464
        %466 = vrot.lane.b32.xlu0 %v241, 4
        %v467 = vpop.permute.xlu0 %466
        %468 = vrot.lane.b32.xlu0 %v242, 4
        %v469 = vpop.permute.xlu0 %468
        %470 = vrot.lane.b32.xlu0 %v243, 4
        %v471 = vpop.permute.xlu0 %470
        %472 = vrot.lane.b32.xlu0 %v244, 4
        %v473 = vpop.permute.xlu0 %472
        %474 = vrot.lane.b32.xlu0 %v245, 4
        %v475 = vpop.permute.xlu0 %474
        %476 = vrot.lane.b32.xlu0 %v246, 4
        %v477 = vpop.permute.xlu0 %476
        %478 = vrot.lane.b32.xlu0 %v247, 4
        %v479 = vpop.permute.xlu0 %478
        %480 = vrot.lane.b32.xlu0 %v248, 4
        %v481 = vpop.permute.xlu0 %480
        %vm514 = vcmask 64544
        %515 = vst.msk [vmem:[%s384] sm:$0xff] %vm514, %v419
        %516 = vst.msk [vmem:[%s384 + $0x8] sm:$0xff] %vm514, %v421
        %517 = vst.msk [vmem:[%s384 + $0x10] sm:$0xff] %vm514, %v423
        %518 = vst.msk [vmem:[%s384 + $0x18] sm:$0xff] %vm514, %v425
        %519 = vst.msk [vmem:[%s384 + $0x20] sm:$0xff] %vm514, %v427
        %520 = vst.msk [vmem:[%s384 + $0x28] sm:$0xff] %vm514, %v429
        %521 = vst.msk [vmem:[%s384 + $0x30] sm:$0xff] %vm514, %v431
        %522 = vst.msk [vmem:[%s384 + $0x38] sm:$0xff] %vm514, %v433
        %523 = vst.msk [vmem:[%s384 + $0x40] sm:$0xff] %vm514, %v435
        %524 = vst.msk [vmem:[%s384 + $0x48] sm:$0xff] %vm514, %v437
        %525 = vst.msk [vmem:[%s384 + $0x50] sm:$0xff] %vm514, %v439
        %526 = vst.msk [vmem:[%s384 + $0x58] sm:$0xff] %vm514, %v441
        %527 = vst.msk [vmem:[%s384 + $0x60] sm:$0xff] %vm514, %v443
        %528 = vst.msk [vmem:[%s384 + $0x68] sm:$0xff] %vm514, %v445
        %529 = vst.msk [vmem:[%s384 + $0x70] sm:$0xff] %vm514, %v447
        %530 = vst.msk [vmem:[%s384 + $0x78] sm:$0xff] %vm514, %v449
        %531 = vst.msk [vmem:[%s384 + $0x80] sm:$0xff] %vm514, %v451
        %532 = vst.msk [vmem:[%s384 + $0x88] sm:$0xff] %vm514, %v453
        %533 = vst.msk [vmem:[%s384 + $0x90] sm:$0xff] %vm514, %v455
        %534 = vst.msk [vmem:[%s384 + $0x98] sm:$0xff] %vm514, %v457
        %535 = vst.msk [vmem:[%s384 + $0xa0] sm:$0xff] %vm514, %v459
        %536 = vst.msk [vmem:[%s384 + $0xa8] sm:$0xff] %vm514, %v461
        %537 = vst.msk [vmem:[%s384 + $0xb0] sm:$0xff] %vm514, %v463
        %538 = vst.msk [vmem:[%s384 + $0xb8] sm:$0xff] %vm514, %v465
        %539 = vst.msk [vmem:[%s384 + $0xc0] sm:$0xff] %vm514, %v467
        %540 = vst.msk [vmem:[%s384 + $0xc8] sm:$0xff] %vm514, %v469
        %541 = vst.msk [vmem:[%s384 + $0xd0] sm:$0xff] %vm514, %v471
        %542 = vst.msk [vmem:[%s384 + $0xd8] sm:$0xff] %vm514, %v473
        %543 = vst.msk [vmem:[%s384 + $0xe0] sm:$0xff] %vm514, %v475
        %544 = vst.msk [vmem:[%s384 + $0xe8] sm:$0xff] %vm514, %v477
        %545 = vst.msk [vmem:[%s384 + $0xf0] sm:$0xff] %vm514, %v479
        %546 = vst.msk [vmem:[%s384 + $0xf8] sm:$0xff] %vm514, %v481
        %vm547 = vcmask 1046528
        %v548 = vrot.slane %v217, 1
        %v549 = vrot.slane %v218, 1
        %v550 = vsel %vm547, %v548, %v549
        %v551 = vrot.slane %v219, 1
        %v552 = vrot.slane %v220, 1
        %v553 = vsel %vm547, %v551, %v552
        %v554 = vrot.slane %v221, 1
        %v555 = vrot.slane %v222, 1
        %v556 = vsel %vm547, %v554, %v555
        %v557 = vrot.slane %v223, 1
        %v558 = vrot.slane %v224, 1
        %v559 = vsel %vm547, %v557, %v558
        %v560 = vrot.slane %v225, 1
        %v561 = vrot.slane %v226, 1
        %v562 = vsel %vm547, %v560, %v561
        %v563 = vrot.slane %v227, 1
        %v564 = vrot.slane %v228, 1
        %v565 = vsel %vm547, %v563, %v564
        %v566 = vrot.slane %v229, 1
        %v567 = vrot.slane %v230, 1
        %v568 = vsel %vm547, %v566, %v567
        %v569 = vrot.slane %v231, 1
        %v570 = vrot.slane %v232, 1
        %v571 = vsel %vm547, %v569, %v570
        %v572 = vrot.slane %v233, 1
        %v573 = vrot.slane %v234, 1
        %v574 = vsel %vm547, %v572, %v573
        %v575 = vrot.slane %v235, 1
        %v576 = vrot.slane %v236, 1
        %v577 = vsel %vm547, %v575, %v576
        %v578 = vrot.slane %v237, 1
        %v579 = vrot.slane %v238, 1
        %v580 = vsel %vm547, %v578, %v579
        %v581 = vrot.slane %v239, 1
        %v582 = vrot.slane %v240, 1
        %v583 = vsel %vm547, %v581, %v582
        %v584 = vrot.slane %v241, 1
        %v585 = vrot.slane %v242, 1
        %v586 = vsel %vm547, %v584, %v585
        %v587 = vrot.slane %v243, 1
        %v588 = vrot.slane %v244, 1
        %v589 = vsel %vm547, %v587, %v588
        %v590 = vrot.slane %v245, 1
        %v591 = vrot.slane %v246, 1
        %v592 = vsel %vm547, %v590, %v591
        %v593 = vrot.slane %v247, 1
        %v594 = vrot.slane %v248, 1
        %v595 = vsel %vm547, %v593, %v594
        %v612 = vsel %vm547, %v549, 0.0
        %v613 = vsel %vm547, %v552, 0.0
        %v614 = vsel %vm547, %v555, 0.0
        %v615 = vsel %vm547, %v558, 0.0
        %v616 = vsel %vm547, %v561, 0.0
        %v617 = vsel %vm547, %v564, 0.0
        %v618 = vsel %vm547, %v567, 0.0
        %v619 = vsel %vm547, %v570, 0.0
        %v620 = vsel %vm547, %v573, 0.0
        %v621 = vsel %vm547, %v576, 0.0
        %v622 = vsel %vm547, %v579, 0.0
        %v623 = vsel %vm547, %v582, 0.0
        %v624 = vsel %vm547, %v585, 0.0
        %v625 = vsel %vm547, %v588, 0.0
        %v626 = vsel %vm547, %v591, 0.0
        %v627 = vsel %vm547, %v594, 0.0
        %644 = vrot.lane.b32.xlu0 %v550, 8
        %v645 = vpop.permute.xlu0 %644
        %646 = vrot.lane.b32.xlu0 %v612, 8
        %v647 = vpop.permute.xlu0 %646
        %648 = vrot.lane.b32.xlu0 %v553, 8
        %v649 = vpop.permute.xlu0 %648
        %650 = vrot.lane.b32.xlu0 %v613, 8
        %v651 = vpop.permute.xlu0 %650
        %652 = vrot.lane.b32.xlu0 %v556, 8
        %v653 = vpop.permute.xlu0 %652
        %654 = vrot.lane.b32.xlu0 %v614, 8
        %v655 = vpop.permute.xlu0 %654
        %656 = vrot.lane.b32.xlu0 %v559, 8
        %v657 = vpop.permute.xlu0 %656
        %658 = vrot.lane.b32.xlu0 %v615, 8
        %v659 = vpop.permute.xlu0 %658
        %660 = vrot.lane.b32.xlu0 %v562, 8
        %v661 = vpop.permute.xlu0 %660
        %662 = vrot.lane.b32.xlu0 %v616, 8
        %v663 = vpop.permute.xlu0 %662
        %664 = vrot.lane.b32.xlu0 %v565, 8
        %v665 = vpop.permute.xlu0 %664
        %666 = vrot.lane.b32.xlu0 %v617, 8
        %v667 = vpop.permute.xlu0 %666
        %668 = vrot.lane.b32.xlu0 %v568, 8
        %v669 = vpop.permute.xlu0 %668
        %670 = vrot.lane.b32.xlu0 %v618, 8
        %v671 = vpop.permute.xlu0 %670
        %672 = vrot.lane.b32.xlu0 %v571, 8
        %v673 = vpop.permute.xlu0 %672
        %674 = vrot.lane.b32.xlu0 %v619, 8
        %v675 = vpop.permute.xlu0 %674
        %676 = vrot.lane.b32.xlu0 %v574, 8
        %v677 = vpop.permute.xlu0 %676
        %678 = vrot.lane.b32.xlu0 %v620, 8
        %v679 = vpop.permute.xlu0 %678
        %680 = vrot.lane.b32.xlu0 %v577, 8
        %v681 = vpop.permute.xlu0 %680
        %682 = vrot.lane.b32.xlu0 %v621, 8
        %v683 = vpop.permute.xlu0 %682
        %684 = vrot.lane.b32.xlu0 %v580, 8
        %v685 = vpop.permute.xlu0 %684
        %686 = vrot.lane.b32.xlu0 %v622, 8
        %v687 = vpop.permute.xlu0 %686
        %688 = vrot.lane.b32.xlu0 %v583, 8
        %v689 = vpop.permute.xlu0 %688
        %690 = vrot.lane.b32.xlu0 %v623, 8
        %v691 = vpop.permute.xlu0 %690
        %692 = vrot.lane.b32.xlu0 %v586, 8
        %v693 = vpop.permute.xlu0 %692
        %694 = vrot.lane.b32.xlu0 %v624, 8
        %v695 = vpop.permute.xlu0 %694
        %696 = vrot.lane.b32.xlu0 %v589, 8
        %v697 = vpop.permute.xlu0 %696
        %698 = vrot.lane.b32.xlu0 %v625, 8
        %v699 = vpop.permute.xlu0 %698
        %700 = vrot.lane.b32.xlu0 %v592, 8
        %v701 = vpop.permute.xlu0 %700
        %702 = vrot.lane.b32.xlu0 %v626, 8
        %v703 = vpop.permute.xlu0 %702
        %704 = vrot.lane.b32.xlu0 %v595, 8
        %v705 = vpop.permute.xlu0 %704
        %706 = vrot.lane.b32.xlu0 %v627, 8
        %v707 = vpop.permute.xlu0 %706
        %vm740 = vcmask 97344
        %741 = vst.msk [vmem:[%s384] sm:$0xff] %vm740, %v645
        %742 = vst.msk [vmem:[%s384 + $0x8] sm:$0xff] %vm740, %v647
        %743 = vst.msk [vmem:[%s384 + $0x10] sm:$0xff] %vm740, %v649
        %744 = vst.msk [vmem:[%s384 + $0x18] sm:$0xff] %vm740, %v651
        %745 = vst.msk [vmem:[%s384 + $0x20] sm:$0xff] %vm740, %v653
        %746 = vst.msk [vmem:[%s384 + $0x28] sm:$0xff] %vm740, %v655
        %747 = vst.msk [vmem:[%s384 + $0x30] sm:$0xff] %vm740, %v657
        %748 = vst.msk [vmem:[%s384 + $0x38] sm:$0xff] %vm740, %v659
        %749 = vst.msk [vmem:[%s384 + $0x40] sm:$0xff] %vm740, %v661
        %750 = vst.msk [vmem:[%s384 + $0x48] sm:$0xff] %vm740, %v663
        %751 = vst.msk [vmem:[%s384 + $0x50] sm:$0xff] %vm740, %v665
        %752 = vst.msk [vmem:[%s384 + $0x58] sm:$0xff] %vm740, %v667
        %753 = vst.msk [vmem:[%s384 + $0x60] sm:$0xff] %vm740, %v669
        %754 = vst.msk [vmem:[%s384 + $0x68] sm:$0xff] %vm740, %v671
        %755 = vst.msk [vmem:[%s384 + $0x70] sm:$0xff] %vm740, %v673
        %756 = vst.msk [vmem:[%s384 + $0x78] sm:$0xff] %vm740, %v675
        %757 = vst.msk [vmem:[%s384 + $0x80] sm:$0xff] %vm740, %v677
        %758 = vst.msk [vmem:[%s384 + $0x88] sm:$0xff] %vm740, %v679
        %759 = vst.msk [vmem:[%s384 + $0x90] sm:$0xff] %vm740, %v681
        %760 = vst.msk [vmem:[%s384 + $0x98] sm:$0xff] %vm740, %v683
        %761 = vst.msk [vmem:[%s384 + $0xa0] sm:$0xff] %vm740, %v685
        %762 = vst.msk [vmem:[%s384 + $0xa8] sm:$0xff] %vm740, %v687
        %763 = vst.msk [vmem:[%s384 + $0xb0] sm:$0xff] %vm740, %v689
        %764 = vst.msk [vmem:[%s384 + $0xb8] sm:$0xff] %vm740, %v691
        %765 = vst.msk [vmem:[%s384 + $0xc0] sm:$0xff] %vm740, %v693
        %766 = vst.msk [vmem:[%s384 + $0xc8] sm:$0xff] %vm740, %v695
        %767 = vst.msk [vmem:[%s384 + $0xd0] sm:$0xff] %vm740, %v697
        %768 = vst.msk [vmem:[%s384 + $0xd8] sm:$0xff] %vm740, %v699
        %769 = vst.msk [vmem:[%s384 + $0xe0] sm:$0xff] %vm740, %v701
        %770 = vst.msk [vmem:[%s384 + $0xe8] sm:$0xff] %vm740, %v703
        %771 = vst.msk [vmem:[%s384 + $0xf0] sm:$0xff] %vm740, %v705
        %772 = vst.msk [vmem:[%s384 + $0xf8] sm:$0xff] %vm740, %v707
        %v773 = vld [vmem:[#allocation2] sm:$0xff]
        %v774 = vld [vmem:[#allocation2 + $0x8] sm:$0xff]
        %v775 = vld [vmem:[#allocation2 + $0x10] sm:$0xff]
        %v776 = vld [vmem:[#allocation2 + $0x18] sm:$0xff]
        %v777 = vld [vmem:[#allocation2 + $0x20] sm:$0xff]
        %v778 = vld [vmem:[#allocation2 + $0x28] sm:$0xff]
        %v779 = vld [vmem:[#allocation2 + $0x30] sm:$0xff]
        %v780 = vld [vmem:[#allocation2 + $0x38] sm:$0xff]
        %v781 = vld [vmem:[#allocation2 + $0x40] sm:$0xff]
        %v782 = vld [vmem:[#allocation2 + $0x48] sm:$0xff]
        %v783 = vld [vmem:[#allocation2 + $0x50] sm:$0xff]
        %v784 = vld [vmem:[#allocation2 + $0x58] sm:$0xff]
        %v785 = vld [vmem:[#allocation2 + $0x60] sm:$0xff]
        %v786 = vld [vmem:[#allocation2 + $0x68] sm:$0xff]
        %v787 = vld [vmem:[#allocation2 + $0x70] sm:$0xff]
        %v788 = vld [vmem:[#allocation2 + $0x78] sm:$0xff]
        %v789 = vld [vmem:[#allocation2 + $0x80] sm:$0xff]
        %v790 = vld [vmem:[#allocation2 + $0x88] sm:$0xff]
        %v791 = vld [vmem:[#allocation2 + $0x90] sm:$0xff]
        %v792 = vld [vmem:[#allocation2 + $0x98] sm:$0xff]
        %v793 = vld [vmem:[#allocation2 + $0xa0] sm:$0xff]
        %v794 = vld [vmem:[#allocation2 + $0xa8] sm:$0xff]
        %v795 = vld [vmem:[#allocation2 + $0xb0] sm:$0xff]
        %v796 = vld [vmem:[#allocation2 + $0xb8] sm:$0xff]
        %v797 = vld [vmem:[#allocation2 + $0xc0] sm:$0xff]
        %v798 = vld [vmem:[#allocation2 + $0xc8] sm:$0xff]
        %v799 = vld [vmem:[#allocation2 + $0xd0] sm:$0xff]
        %v800 = vld [vmem:[#allocation2 + $0xd8] sm:$0xff]
        %v801 = vld [vmem:[#allocation2 + $0xe0] sm:$0xff]
        %v802 = vld [vmem:[#allocation2 + $0xe8] sm:$0xff]
        %v803 = vld [vmem:[#allocation2 + $0xf0] sm:$0xff]
        %v804 = vld [vmem:[#allocation2 + $0xf8] sm:$0xff]
        %v805 = vld [vmem:[%s1] sm:$0xff]
        %v806 = vld [vmem:[%s1 + $0x8] sm:$0xf]
        %v807 = vld [vmem:[%s384] sm:$0xff]
        %v808 = vld [vmem:[%s384 + $0x8] sm:$0xff]
        %v809 = vld [vmem:[%s384 + $0x10] sm:$0xff]
        %v810 = vld [vmem:[%s384 + $0x18] sm:$0xff]
        %v811 = vld [vmem:[%s384 + $0x20] sm:$0xff]
        %v812 = vld [vmem:[%s384 + $0x28] sm:$0xff]
        %v813 = vld [vmem:[%s384 + $0x30] sm:$0xff]
        %v814 = vld [vmem:[%s384 + $0x38] sm:$0xff]
        %v815 = vld [vmem:[%s384 + $0x40] sm:$0xff]
        %v816 = vld [vmem:[%s384 + $0x48] sm:$0xff]
        %v817 = vld [vmem:[%s384 + $0x50] sm:$0xff]
        %v818 = vld [vmem:[%s384 + $0x58] sm:$0xff]
        %v819 = vld [vmem:[%s384 + $0x60] sm:$0xff]
        %v820 = vld [vmem:[%s384 + $0x68] sm:$0xff]
        %v821 = vld [vmem:[%s384 + $0x70] sm:$0xff]
        %v822 = vld [vmem:[%s384 + $0x78] sm:$0xff]
        %v823 = vld [vmem:[%s384 + $0x80] sm:$0xff]
        %v824 = vld [vmem:[%s384 + $0x88] sm:$0xff]
        %v825 = vld [vmem:[%s384 + $0x90] sm:$0xff]
        %v826 = vld [vmem:[%s384 + $0x98] sm:$0xff]
        %v827 = vld [vmem:[%s384 + $0xa0] sm:$0xff]
        %v828 = vld [vmem:[%s384 + $0xa8] sm:$0xff]
        %v829 = vld [vmem:[%s384 + $0xb0] sm:$0xff]
        %v830 = vld [vmem:[%s384 + $0xb8] sm:$0xff]
        %v831 = vld [vmem:[%s384 + $0xc0] sm:$0xff]
        %v832 = vld [vmem:[%s384 + $0xc8] sm:$0xff]
        %v833 = vld [vmem:[%s384 + $0xd0] sm:$0xff]
        %v834 = vld [vmem:[%s384 + $0xd8] sm:$0xff]
        %v835 = vld [vmem:[%s384 + $0xe0] sm:$0xff]
        %v836 = vld [vmem:[%s384 + $0xe8] sm:$0xff]
        %v837 = vld [vmem:[%s384 + $0xf0] sm:$0xff]
        %v838 = vld [vmem:[%s384 + $0xf8] sm:$0xff]
        %s839 = scalar_lea.vmem %s1, 16
        %v840 = vld [vmem:[%s839] sm:$0xff]
        %v841 = vld [vmem:[%s839 + $0x8] sm:$0xf]
        %v843 = vsel %vm249, %v807, 0
        %v846 = vsel %vm249, %v808, 0
        %v849 = vsel %vm249, %v809, 0
        %v852 = vsel %vm249, %v810, 0
        %v855 = vsel %vm249, %v811, 0
        %v858 = vsel %vm249, %v812, 0
        %v861 = vsel %vm249, %v813, 0
        %v864 = vsel %vm249, %v814, 0
        %v867 = vsel %vm249, %v815, 0
        %v870 = vsel %vm249, %v816, 0
        %v873 = vsel %vm249, %v817, 0
        %v876 = vsel %vm249, %v818, 0
        %v879 = vsel %vm249, %v819, 0
        %v882 = vsel %vm249, %v820, 0
        %v885 = vsel %vm249, %v821, 0
        %v888 = vsel %vm249, %v822, 0
        %v891 = vsel %vm249, %v823, 0
        %v894 = vsel %vm249, %v824, 0
        %v897 = vsel %vm249, %v825, 0
        %v900 = vsel %vm249, %v826, 0
        %v903 = vsel %vm249, %v827, 0
        %v906 = vsel %vm249, %v828, 0
        %v909 = vsel %vm249, %v829, 0
        %v912 = vsel %vm249, %v830, 0
        %v915 = vsel %vm249, %v831, 0
        %v918 = vsel %vm249, %v832, 0
        %v921 = vsel %vm249, %v833, 0
        %v924 = vsel %vm249, %v834, 0
        %v927 = vsel %vm249, %v835, 0
        %v930 = vsel %vm249, %v836, 0
        %v933 = vsel %vm249, %v837, 0
        %v936 = vsel %vm249, %v838, 0
        %vm938 = vcmask 1043456
        %v940 = vsel %vm938, %v841, 0
        %942 = vmatprep.subr.mxu0 0.0
        %943 = vmatpush1.msra.mxu0 0.0
        %944 = vmatprep.subr.mxu0 0.0
        %945 = vmatpush1.msra.mxu0 0.0
        %946 = vmatprep.subr.mxu0 0.0
        %947 = vmatpush1.msra.mxu0 0.0
        %948 = vmatprep.subr.mxu0 0.0
        %949 = vmatpush1.msra.mxu0 0.0
        %950 = vmatprep.subr.mxu0 0.0
        %951 = vmatpush1.msra.mxu0 0.0
        %952 = vmatprep.subr.mxu0 0.0
        %953 = vmatpush1.msra.mxu0 0.0
        %954 = vmatprep.subr.mxu0 0.0
        %955 = vmatpush1.msra.mxu0 0.0
        %956 = vmatprep.subr.mxu0 0.0
        %957 = vmatpush1.msra.mxu0 0.0
        %958 = vmatprep.subr.mxu0 0.0
        %959 = vmatpush1.msra.mxu0 0.0
        %960 = vmatprep.subr.mxu0 0.0
        %961 = vmatpush1.msra.mxu0 0.0
        %962 = vmatprep.subr.mxu0 0.0
        %963 = vmatpush1.msra.mxu0 0.0
        %964 = vmatprep.subr.mxu0 0.0
        %965 = vmatpush1.msra.mxu0 0.0
        %966 = vmatprep.subr.mxu0 0.0
        %967 = vmatpush1.msra.mxu0 0.0
        %968 = vmatprep.subr.mxu0 0.0
        %969 = vmatpush1.msra.mxu0 0.0
        %970 = vmatprep.subr.mxu0 0.0
        %971 = vmatpush1.msra.mxu0 %v940
        %972 = vmatprep.subr.mxu0 0.0
        %973 = vmatpush1.msra.mxu0 %v840
        %974 = vmatprep.subr.mxu0 0.0
        %975 = vmatpush2.msra.mxu0 0.0
        %976 = vmatprep.subr.mxu0 0.0
        %977 = vmatpush2.msra.mxu0 0.0
        %978 = vmatprep.subr.mxu0 0.0
        %979 = vmatpush2.msra.mxu0 0.0
        %980 = vmatprep.subr.mxu0 0.0
        %981 = vmatpush2.msra.mxu0 0.0
        %982 = vmatprep.subr.mxu0 0.0
        %983 = vmatpush2.msra.mxu0 0.0
        %984 = vmatprep.subr.mxu0 0.0
        %985 = vmatpush2.msra.mxu0 0.0
        %986 = vmatprep.subr.mxu0 0.0
        %987 = vmatpush2.msra.mxu0 0.0
        %988 = vmatprep.subr.mxu0 0.0
        %989 = vmatpush2.msra.mxu0 0.0
        %990 = vmatprep.subr.mxu0 0.0
        %991 = vmatpush2.msra.mxu0 0.0
        %992 = vmatprep.subr.mxu0 0.0
        %993 = vmatpush2.msra.mxu0 0.0
        %994 = vmatprep.subr.mxu0 0.0
        %995 = vmatpush2.msra.mxu0 0.0
        %996 = vmatprep.subr.mxu0 0.0
        %997 = vmatpush2.msra.mxu0 0.0
        %998 = vmatprep.subr.mxu0 0.0
        %999 = vmatpush2.msra.mxu0 0.0
        %1000 = vmatprep.subr.mxu0 0.0
        %1001 = vmatpush2.msra.mxu0 0.0
        %1002 = vmatprep.subr.mxu0 0.0
        %1003 = vmatpush2.msra.mxu0 0.0
        %1004 = vmatprep.subr.mxu0 0.0
        %1005 = vmatpush2.msra.mxu0 0.0
        %1006 = vmatprep.mubr.f32.mxu0 0.0
        %1007 = vmatmul.mubr.f32.gmra.mxu0 %v843
        %v1008 = vpop.f32.mrf.mxu0
        %v1009 = vadd.f32 0.0, %v1008
        %v1010 = vpop.f32.mrf.mxu0
        %1011 = vmatprep.mubr.f32.mxu0 0.0
        %1012 = vmatmul.mubr.f32.gmra.mxu0 %v846
        %v1013 = vpop.f32.mrf.mxu0
        %v1014 = vadd.f32 0.0, %v1013
        %v1015 = vpop.f32.mrf.mxu0
        %1016 = vmatprep.mubr.f32.mxu0 0.0
        %1017 = vmatmul.mubr.f32.gmra.mxu0 %v849
        %v1018 = vpop.f32.mrf.mxu0
        %v1019 = vadd.f32 0.0, %v1018
        %v1020 = vpop.f32.mrf.mxu0
        %1021 = vmatprep.mubr.f32.mxu0 0.0
        %1022 = vmatmul.mubr.f32.gmra.mxu0 %v852
        %v1023 = vpop.f32.mrf.mxu0
        %v1024 = vadd.f32 0.0, %v1023
        %v1025 = vpop.f32.mrf.mxu0
        %1026 = vmatprep.mubr.f32.mxu0 0.0
        %1027 = vmatmul.mubr.f32.gmra.mxu0 %v855
        %v1028 = vpop.f32.mrf.mxu0
        %v1029 = vadd.f32 0.0, %v1028
        %v1030 = vpop.f32.mrf.mxu0
        %1031 = vmatprep.mubr.f32.mxu0 0.0
        %1032 = vmatmul.mubr.f32.gmra.mxu0 %v858
        %v1033 = vpop.f32.mrf.mxu0
        %v1034 = vadd.f32 0.0, %v1033
        %v1035 = vpop.f32.mrf.mxu0
        %1036 = vmatprep.mubr.f32.mxu0 0.0
        %1037 = vmatmul.mubr.f32.gmra.mxu0 %v861
        %v1038 = vpop.f32.mrf.mxu0
        %v1039 = vadd.f32 0.0, %v1038
        %v1040 = vpop.f32.mrf.mxu0
        %1041 = vmatprep.mubr.f32.mxu0 0.0
        %1042 = vmatmul.mubr.f32.gmra.mxu0 %v864
        %v1043 = vpop.f32.mrf.mxu0
        %v1044 = vadd.f32 0.0, %v1043
        %v1045 = vpop.f32.mrf.mxu0
        %1046 = vmatprep.mubr.f32.mxu0 0.0
        %1047 = vmatmul.mubr.f32.gmra.mxu0 %v867
        %v1048 = vpop.f32.mrf.mxu0
        %v1049 = vadd.f32 0.0, %v1048
        %v1050 = vpop.f32.mrf.mxu0
        %1051 = vmatprep.mubr.f32.mxu0 0.0
        %1052 = vmatmul.mubr.f32.gmra.mxu0 %v870
        %v1053 = vpop.f32.mrf.mxu0
        %v1054 = vadd.f32 0.0, %v1053
        %v1055 = vpop.f32.mrf.mxu0
        %1056 = vmatprep.mubr.f32.mxu0 0.0
        %1057 = vmatmul.mubr.f32.gmra.mxu0 %v873
        %v1058 = vpop.f32.mrf.mxu0
        %v1059 = vadd.f32 0.0, %v1058
        %v1060 = vpop.f32.mrf.mxu0
        %1061 = vmatprep.mubr.f32.mxu0 0.0
        %1062 = vmatmul.mubr.f32.gmra.mxu0 %v876
        %v1063 = vpop.f32.mrf.mxu0
        %v1064 = vadd.f32 0.0, %v1063
        %v1065 = vpop.f32.mrf.mxu0
        %1066 = vmatprep.mubr.f32.mxu0 0.0
        %1067 = vmatmul.mubr.f32.gmra.mxu0 %v879
        %v1068 = vpop.f32.mrf.mxu0
        %v1069 = vadd.f32 0.0, %v1068
        %v1070 = vpop.f32.mrf.mxu0
        %1071 = vmatprep.mubr.f32.mxu0 0.0
        %1072 = vmatmul.mubr.f32.gmra.mxu0 %v882
        %v1073 = vpop.f32.mrf.mxu0
        %v1074 = vadd.f32 0.0, %v1073
        %v1075 = vpop.f32.mrf.mxu0
        %1076 = vmatprep.mubr.f32.mxu0 0.0
        %1077 = vmatmul.mubr.f32.gmra.mxu0 %v885
        %v1078 = vpop.f32.mrf.mxu0
        %v1079 = vadd.f32 0.0, %v1078
        %v1080 = vpop.f32.mrf.mxu0
        %1081 = vmatprep.mubr.f32.mxu0 0.0
        %1082 = vmatmul.mubr.f32.gmra.mxu0 %v888
        %v1083 = vpop.f32.mrf.mxu0
        %v1084 = vadd.f32 0.0, %v1083
        %v1085 = vpop.f32.mrf.mxu0
        %1086 = vmatprep.mubr.f32.mxu0 0.0
        %1087 = vmatmul.mubr.f32.gmra.mxu0 %v891
        %v1088 = vpop.f32.mrf.mxu0
        %v1089 = vadd.f32 0.0, %v1088
        %v1090 = vpop.f32.mrf.mxu0
        %1091 = vmatprep.mubr.f32.mxu0 0.0
        %1092 = vmatmul.mubr.f32.gmra.mxu0 %v894
        %v1093 = vpop.f32.mrf.mxu0
        %v1094 = vadd.f32 0.0, %v1093
        %v1095 = vpop.f32.mrf.mxu0
        %1096 = vmatprep.mubr.f32.mxu0 0.0
        %1097 = vmatmul.mubr.f32.gmra.mxu0 %v897
        %v1098 = vpop.f32.mrf.mxu0
        %v1099 = vadd.f32 0.0, %v1098
        %v1100 = vpop.f32.mrf.mxu0
        %1101 = vmatprep.mubr.f32.mxu0 0.0
        %1102 = vmatmul.mubr.f32.gmra.mxu0 %v900
        %v1103 = vpop.f32.mrf.mxu0
        %v1104 = vadd.f32 0.0, %v1103
        %v1105 = vpop.f32.mrf.mxu0
        %1106 = vmatprep.mubr.f32.mxu0 0.0
        %1107 = vmatmul.mubr.f32.gmra.mxu0 %v903
        %v1108 = vpop.f32.mrf.mxu0
        %v1109 = vadd.f32 0.0, %v1108
        %v1110 = vpop.f32.mrf.mxu0
        %1111 = vmatprep.mubr.f32.mxu0 0.0
        %1112 = vmatmul.mubr.f32.gmra.mxu0 %v906
        %v1113 = vpop.f32.mrf.mxu0
        %v1114 = vadd.f32 0.0, %v1113
        %v1115 = vpop.f32.mrf.mxu0
        %1116 = vmatprep.mubr.f32.mxu0 0.0
        %1117 = vmatmul.mubr.f32.gmra.mxu0 %v909
        %v1118 = vpop.f32.mrf.mxu0
        %v1119 = vadd.f32 0.0, %v1118
        %v1120 = vpop.f32.mrf.mxu0
        %1121 = vmatprep.mubr.f32.mxu0 0.0
        %1122 = vmatmul.mubr.f32.gmra.mxu0 %v912
        %v1123 = vpop.f32.mrf.mxu0
        %v1124 = vadd.f32 0.0, %v1123
        %v1125 = vpop.f32.mrf.mxu0
        %1126 = vmatprep.mubr.f32.mxu0 0.0
        %1127 = vmatmul.mubr.f32.gmra.mxu0 %v915
        %v1128 = vpop.f32.mrf.mxu0
        %v1129 = vadd.f32 0.0, %v1128
        %v1130 = vpop.f32.mrf.mxu0
        %1131 = vmatprep.mubr.f32.mxu0 0.0
        %1132 = vmatmul.mubr.f32.gmra.mxu0 %v918
        %v1133 = vpop.f32.mrf.mxu0
        %v1134 = vadd.f32 0.0, %v1133
        %v1135 = vpop.f32.mrf.mxu0
        %1136 = vmatprep.mubr.f32.mxu0 0.0
        %1137 = vmatmul.mubr.f32.gmra.mxu0 %v921
        %v1138 = vpop.f32.mrf.mxu0
        %v1139 = vadd.f32 0.0, %v1138
        %v1140 = vpop.f32.mrf.mxu0
        %1141 = vmatprep.mubr.f32.mxu0 0.0
        %1142 = vmatmul.mubr.f32.gmra.mxu0 %v924
        %v1143 = vpop.f32.mrf.mxu0
        %v1144 = vadd.f32 0.0, %v1143
        %v1145 = vpop.f32.mrf.mxu0
        %1146 = vmatprep.mubr.f32.mxu0 0.0
        %1147 = vmatmul.mubr.f32.gmra.mxu0 %v927
        %v1148 = vpop.f32.mrf.mxu0
        %v1149 = vadd.f32 0.0, %v1148
        %v1150 = vpop.f32.mrf.mxu0
        %1151 = vmatprep.mubr.f32.mxu0 0.0
        %1152 = vmatmul.mubr.f32.gmra.mxu0 %v930
        %v1153 = vpop.f32.mrf.mxu0
        %v1154 = vadd.f32 0.0, %v1153
        %v1155 = vpop.f32.mrf.mxu0
        %1156 = vmatprep.mubr.f32.mxu0 0.0
        %1157 = vmatmul.mubr.f32.gmra.mxu0 %v933
        %v1158 = vpop.f32.mrf.mxu0
        %v1159 = vadd.f32 0.0, %v1158
        %v1160 = vpop.f32.mrf.mxu0
        %1161 = vmatprep.mubr.f32.mxu0 0.0
        %1162 = vmatmul.mubr.f32.gmra.mxu0 %v936
        %v1163 = vpop.f32.mrf.mxu0
        %v1164 = vadd.f32 0.0, %v1163
        %v1165 = vpop.f32.mrf.mxu0
        %1166 = vdwg.mxu0
        %v1168 = vsel %vm249, %v773, 0
        %v1171 = vsel %vm249, %v774, 0
        %v1174 = vsel %vm249, %v775, 0
        %v1177 = vsel %vm249, %v776, 0
        %v1180 = vsel %vm249, %v777, 0
        %v1183 = vsel %vm249, %v778, 0
        %v1186 = vsel %vm249, %v779, 0
        %v1189 = vsel %vm249, %v780, 0
        %v1192 = vsel %vm249, %v781, 0
        %v1195 = vsel %vm249, %v782, 0
        %v1198 = vsel %vm249, %v783, 0
        %v1201 = vsel %vm249, %v784, 0
        %v1204 = vsel %vm249, %v785, 0
        %v1207 = vsel %vm249, %v786, 0
        %v1210 = vsel %vm249, %v787, 0
        %v1213 = vsel %vm249, %v788, 0
        %v1216 = vsel %vm249, %v789, 0
        %v1219 = vsel %vm249, %v790, 0
        %v1222 = vsel %vm249, %v791, 0
        %v1225 = vsel %vm249, %v792, 0
        %v1228 = vsel %vm249, %v793, 0
        %v1231 = vsel %vm249, %v794, 0
        %v1234 = vsel %vm249, %v795, 0
        %v1237 = vsel %vm249, %v796, 0
        %v1240 = vsel %vm249, %v797, 0
        %v1243 = vsel %vm249, %v798, 0
        %v1246 = vsel %vm249, %v799, 0
        %v1249 = vsel %vm249, %v800, 0
        %v1252 = vsel %vm249, %v801, 0
        %v1255 = vsel %vm249, %v802, 0
        %v1258 = vsel %vm249, %v803, 0
        %v1261 = vsel %vm249, %v804, 0
        %v1264 = vsel %vm938, %v806, 0
        %1266 = vmatprep.subr.mxu0 0.0
        %1267 = vmatpush1.msra.mxu0 0.0
        %1268 = vmatprep.subr.mxu0 0.0
        %1269 = vmatpush1.msra.mxu0 0.0
        %1270 = vmatprep.subr.mxu0 0.0
        %1271 = vmatpush1.msra.mxu0 0.0
        %1272 = vmatprep.subr.mxu0 0.0
        %1273 = vmatpush1.msra.mxu0 0.0
        %1274 = vmatprep.subr.mxu0 0.0
        %1275 = vmatpush1.msra.mxu0 0.0
        %1276 = vmatprep.subr.mxu0 0.0
        %1277 = vmatpush1.msra.mxu0 0.0
        %1278 = vmatprep.subr.mxu0 0.0
        %1279 = vmatpush1.msra.mxu0 0.0
        %1280 = vmatprep.subr.mxu0 0.0
        %1281 = vmatpush1.msra.mxu0 0.0
        %1282 = vmatprep.subr.mxu0 0.0
        %1283 = vmatpush1.msra.mxu0 0.0
        %1284 = vmatprep.subr.mxu0 0.0
        %1285 = vmatpush1.msra.mxu0 0.0
        %1286 = vmatprep.subr.mxu0 0.0
        %1287 = vmatpush1.msra.mxu0 0.0
        %1288 = vmatprep.subr.mxu0 0.0
        %1289 = vmatpush1.msra.mxu0 0.0
        %1290 = vmatprep.subr.mxu0 0.0
        %1291 = vmatpush1.msra.mxu0 0.0
        %1292 = vmatprep.subr.mxu0 0.0
        %1293 = vmatpush1.msra.mxu0 0.0
        %1294 = vmatprep.subr.mxu0 0.0
        %1295 = vmatpush1.msra.mxu0 %v1264
        %1296 = vmatprep.subr.mxu0 0.0
        %1297 = vmatpush1.msra.mxu0 %v805
        %1298 = vmatprep.subr.mxu0 0.0
        %1299 = vmatpush2.msra.mxu0 0.0
        %1300 = vmatprep.subr.mxu0 0.0
        %1301 = vmatpush2.msra.mxu0 0.0
        %1302 = vmatprep.subr.mxu0 0.0
        %1303 = vmatpush2.msra.mxu0 0.0
        %1304 = vmatprep.subr.mxu0 0.0
        %1305 = vmatpush2.msra.mxu0 0.0
        %1306 = vmatprep.subr.mxu0 0.0
        %1307 = vmatpush2.msra.mxu0 0.0
        %1308 = vmatprep.subr.mxu0 0.0
        %1309 = vmatpush2.msra.mxu0 0.0
        %1310 = vmatprep.subr.mxu0 0.0
        %1311 = vmatpush2.msra.mxu0 0.0
        %1312 = vmatprep.subr.mxu0 0.0
        %1313 = vmatpush2.msra.mxu0 0.0
        %1314 = vmatprep.subr.mxu0 0.0
        %1315 = vmatpush2.msra.mxu0 0.0
        %1316 = vmatprep.subr.mxu0 0.0
        %1317 = vmatpush2.msra.mxu0 0.0
        %1318 = vmatprep.subr.mxu0 0.0
        %1319 = vmatpush2.msra.mxu0 0.0
        %1320 = vmatprep.subr.mxu0 0.0
        %1321 = vmatpush2.msra.mxu0 0.0
        %1322 = vmatprep.subr.mxu0 0.0
        %1323 = vmatpush2.msra.mxu0 0.0
        %1324 = vmatprep.subr.mxu0 0.0
        %1325 = vmatpush2.msra.mxu0 0.0
        %1326 = vmatprep.subr.mxu0 0.0
        %1327 = vmatpush2.msra.mxu0 0.0
        %1328 = vmatprep.subr.mxu0 0.0
        %1329 = vmatpush2.msra.mxu0 0.0
        %1330 = vmatprep.mubr.f32.mxu0 0.0
        %1331 = vmatmul.mubr.f32.gmra.mxu0 %v1168
        %v1332 = vpop.f32.mrf.mxu0
        %v1333 = vadd.f32 %v1009, %v1332
        %v1334 = vpop.f32.mrf.mxu0
        %1335 = vmatprep.mubr.f32.mxu0 0.0
        %1336 = vmatmul.mubr.f32.gmra.mxu0 %v1171
        %v1337 = vpop.f32.mrf.mxu0
        %v1338 = vadd.f32 %v1014, %v1337
        %v1339 = vpop.f32.mrf.mxu0
        %1340 = vmatprep.mubr.f32.mxu0 0.0
        %1341 = vmatmul.mubr.f32.gmra.mxu0 %v1174
        %v1342 = vpop.f32.mrf.mxu0
        %v1343 = vadd.f32 %v1019, %v1342
        %v1344 = vpop.f32.mrf.mxu0
        %1345 = vmatprep.mubr.f32.mxu0 0.0
        %1346 = vmatmul.mubr.f32.gmra.mxu0 %v1177
        %v1347 = vpop.f32.mrf.mxu0
        %v1348 = vadd.f32 %v1024, %v1347
        %v1349 = vpop.f32.mrf.mxu0
        %1350 = vmatprep.mubr.f32.mxu0 0.0
        %1351 = vmatmul.mubr.f32.gmra.mxu0 %v1180
        %v1352 = vpop.f32.mrf.mxu0
        %v1353 = vadd.f32 %v1029, %v1352
        %v1354 = vpop.f32.mrf.mxu0
        %1355 = vmatprep.mubr.f32.mxu0 0.0
        %1356 = vmatmul.mubr.f32.gmra.mxu0 %v1183
        %v1357 = vpop.f32.mrf.mxu0
        %v1358 = vadd.f32 %v1034, %v1357
        %v1359 = vpop.f32.mrf.mxu0
        %1360 = vmatprep.mubr.f32.mxu0 0.0
        %1361 = vmatmul.mubr.f32.gmra.mxu0 %v1186
        %v1362 = vpop.f32.mrf.mxu0
        %v1363 = vadd.f32 %v1039, %v1362
        %v1364 = vpop.f32.mrf.mxu0
        %1365 = vmatprep.mubr.f32.mxu0 0.0
        %1366 = vmatmul.mubr.f32.gmra.mxu0 %v1189
        %v1367 = vpop.f32.mrf.mxu0
        %v1368 = vadd.f32 %v1044, %v1367
        %v1369 = vpop.f32.mrf.mxu0
        %1370 = vmatprep.mubr.f32.mxu0 0.0
        %1371 = vmatmul.mubr.f32.gmra.mxu0 %v1192
        %v1372 = vpop.f32.mrf.mxu0
        %v1373 = vadd.f32 %v1049, %v1372
        %v1374 = vpop.f32.mrf.mxu0
        %1375 = vmatprep.mubr.f32.mxu0 0.0
        %1376 = vmatmul.mubr.f32.gmra.mxu0 %v1195
        %v1377 = vpop.f32.mrf.mxu0
        %v1378 = vadd.f32 %v1054, %v1377
        %v1379 = vpop.f32.mrf.mxu0
        %1380 = vmatprep.mubr.f32.mxu0 0.0
        %1381 = vmatmul.mubr.f32.gmra.mxu0 %v1198
        %v1382 = vpop.f32.mrf.mxu0
        %v1383 = vadd.f32 %v1059, %v1382
        %v1384 = vpop.f32.mrf.mxu0
        %1385 = vmatprep.mubr.f32.mxu0 0.0
        %1386 = vmatmul.mubr.f32.gmra.mxu0 %v1201
        %v1387 = vpop.f32.mrf.mxu0
        %v1388 = vadd.f32 %v1064, %v1387
        %v1389 = vpop.f32.mrf.mxu0
        %1390 = vmatprep.mubr.f32.mxu0 0.0
        %1391 = vmatmul.mubr.f32.gmra.mxu0 %v1204
        %v1392 = vpop.f32.mrf.mxu0
        %v1393 = vadd.f32 %v1069, %v1392
        %v1394 = vpop.f32.mrf.mxu0
        %1395 = vmatprep.mubr.f32.mxu0 0.0
        %1396 = vmatmul.mubr.f32.gmra.mxu0 %v1207
        %v1397 = vpop.f32.mrf.mxu0
        %v1398 = vadd.f32 %v1074, %v1397
        %v1399 = vpop.f32.mrf.mxu0
        %1400 = vmatprep.mubr.f32.mxu0 0.0
        %1401 = vmatmul.mubr.f32.gmra.mxu0 %v1210
        %v1402 = vpop.f32.mrf.mxu0
        %v1403 = vadd.f32 %v1079, %v1402
        %v1404 = vpop.f32.mrf.mxu0
        %1405 = vmatprep.mubr.f32.mxu0 0.0
        %1406 = vmatmul.mubr.f32.gmra.mxu0 %v1213
        %v1407 = vpop.f32.mrf.mxu0
        %v1408 = vadd.f32 %v1084, %v1407
        %v1409 = vpop.f32.mrf.mxu0
        %1410 = vmatprep.mubr.f32.mxu0 0.0
        %1411 = vmatmul.mubr.f32.gmra.mxu0 %v1216
        %v1412 = vpop.f32.mrf.mxu0
        %v1413 = vadd.f32 %v1089, %v1412
        %v1414 = vpop.f32.mrf.mxu0
        %1415 = vmatprep.mubr.f32.mxu0 0.0
        %1416 = vmatmul.mubr.f32.gmra.mxu0 %v1219
        %v1417 = vpop.f32.mrf.mxu0
        %v1418 = vadd.f32 %v1094, %v1417
        %v1419 = vpop.f32.mrf.mxu0
        %1420 = vmatprep.mubr.f32.mxu0 0.0
        %1421 = vmatmul.mubr.f32.gmra.mxu0 %v1222
        %v1422 = vpop.f32.mrf.mxu0
        %v1423 = vadd.f32 %v1099, %v1422
        %v1424 = vpop.f32.mrf.mxu0
        %1425 = vmatprep.mubr.f32.mxu0 0.0
        %1426 = vmatmul.mubr.f32.gmra.mxu0 %v1225
        %v1427 = vpop.f32.mrf.mxu0
        %v1428 = vadd.f32 %v1104, %v1427
        %v1429 = vpop.f32.mrf.mxu0
        %1430 = vmatprep.mubr.f32.mxu0 0.0
        %1431 = vmatmul.mubr.f32.gmra.mxu0 %v1228
        %v1432 = vpop.f32.mrf.mxu0
        %v1433 = vadd.f32 %v1109, %v1432
        %v1434 = vpop.f32.mrf.mxu0
        %1435 = vmatprep.mubr.f32.mxu0 0.0
        %1436 = vmatmul.mubr.f32.gmra.mxu0 %v1231
        %v1437 = vpop.f32.mrf.mxu0
        %v1438 = vadd.f32 %v1114, %v1437
        %v1439 = vpop.f32.mrf.mxu0
        %1440 = vmatprep.mubr.f32.mxu0 0.0
        %1441 = vmatmul.mubr.f32.gmra.mxu0 %v1234
        %v1442 = vpop.f32.mrf.mxu0
        %v1443 = vadd.f32 %v1119, %v1442
        %v1444 = vpop.f32.mrf.mxu0
        %1445 = vmatprep.mubr.f32.mxu0 0.0
        %1446 = vmatmul.mubr.f32.gmra.mxu0 %v1237
        %v1447 = vpop.f32.mrf.mxu0
        %v1448 = vadd.f32 %v1124, %v1447
        %v1449 = vpop.f32.mrf.mxu0
        %1450 = vmatprep.mubr.f32.mxu0 0.0
        %1451 = vmatmul.mubr.f32.gmra.mxu0 %v1240
        %v1452 = vpop.f32.mrf.mxu0
        %v1453 = vadd.f32 %v1129, %v1452
        %v1454 = vpop.f32.mrf.mxu0
        %1455 = vmatprep.mubr.f32.mxu0 0.0
        %1456 = vmatmul.mubr.f32.gmra.mxu0 %v1243
        %v1457 = vpop.f32.mrf.mxu0
        %v1458 = vadd.f32 %v1134, %v1457
        %v1459 = vpop.f32.mrf.mxu0
        %1460 = vmatprep.mubr.f32.mxu0 0.0
        %1461 = vmatmul.mubr.f32.gmra.mxu0 %v1246
        %v1462 = vpop.f32.mrf.mxu0
        %v1463 = vadd.f32 %v1139, %v1462
        %v1464 = vpop.f32.mrf.mxu0
        %1465 = vmatprep.mubr.f32.mxu0 0.0
        %1466 = vmatmul.mubr.f32.gmra.mxu0 %v1249
        %v1467 = vpop.f32.mrf.mxu0
        %v1468 = vadd.f32 %v1144, %v1467
        %v1469 = vpop.f32.mrf.mxu0
        %1470 = vmatprep.mubr.f32.mxu0 0.0
        %1471 = vmatmul.mubr.f32.gmra.mxu0 %v1252
        %v1472 = vpop.f32.mrf.mxu0
        %v1473 = vadd.f32 %v1149, %v1472
        %v1474 = vpop.f32.mrf.mxu0
        %1475 = vmatprep.mubr.f32.mxu0 0.0
        %1476 = vmatmul.mubr.f32.gmra.mxu0 %v1255
        %v1477 = vpop.f32.mrf.mxu0
        %v1478 = vadd.f32 %v1154, %v1477
        %v1479 = vpop.f32.mrf.mxu0
        %1480 = vmatprep.mubr.f32.mxu0 0.0
        %1481 = vmatmul.mubr.f32.gmra.mxu0 %v1258
        %v1482 = vpop.f32.mrf.mxu0
        %v1483 = vadd.f32 %v1159, %v1482
        %v1484 = vpop.f32.mrf.mxu0
        %1485 = vmatprep.mubr.f32.mxu0 0.0
        %1486 = vmatmul.mubr.f32.gmra.mxu0 %v1261
        %v1487 = vpop.f32.mrf.mxu0
        %v1488 = vadd.f32 %v1164, %v1487
        %v1489 = vpop.f32.mrf.mxu0
        %1490 = vdwg.mxu0
        %s1491 = scalar_lea.vmem [#allocation2], 32
        %v1492 = vld [vmem:[%s1491] sm:$0xff]
        %v1493 = vld [vmem:[%s1491 + $0x8] sm:$0xff]
        %v1494 = vld [vmem:[%s1491 + $0x10] sm:$0xff]
        %v1495 = vld [vmem:[%s1491 + $0x18] sm:$0xff]
        %v1496 = vld [vmem:[%s1491 + $0x20] sm:$0xff]
        %v1497 = vld [vmem:[%s1491 + $0x28] sm:$0xff]
        %v1498 = vld [vmem:[%s1491 + $0x30] sm:$0xff]
        %v1499 = vld [vmem:[%s1491 + $0x38] sm:$0xff]
        %v1500 = vld [vmem:[%s1491 + $0x40] sm:$0xff]
        %v1501 = vld [vmem:[%s1491 + $0x48] sm:$0xff]
        %v1502 = vld [vmem:[%s1491 + $0x50] sm:$0xff]
        %v1503 = vld [vmem:[%s1491 + $0x58] sm:$0xff]
        %v1504 = vld [vmem:[%s1491 + $0x60] sm:$0xff]
        %v1505 = vld [vmem:[%s1491 + $0x68] sm:$0xff]
        %v1506 = vld [vmem:[%s1491 + $0x70] sm:$0xff]
        %v1507 = vld [vmem:[%s1491 + $0x78] sm:$0xff]
        %v1508 = vld [vmem:[%s1491 + $0x80] sm:$0xff]
        %v1509 = vld [vmem:[%s1491 + $0x88] sm:$0xff]
        %v1510 = vld [vmem:[%s1491 + $0x90] sm:$0xff]
        %v1511 = vld [vmem:[%s1491 + $0x98] sm:$0xff]
        %v1512 = vld [vmem:[%s1491 + $0xa0] sm:$0xff]
        %v1513 = vld [vmem:[%s1491 + $0xa8] sm:$0xff]
        %v1514 = vld [vmem:[%s1491 + $0xb0] sm:$0xff]
        %v1515 = vld [vmem:[%s1491 + $0xb8] sm:$0xff]
        %v1516 = vld [vmem:[%s1491 + $0xc0] sm:$0xff]
        %v1517 = vld [vmem:[%s1491 + $0xc8] sm:$0xff]
        %v1518 = vld [vmem:[%s1491 + $0xd0] sm:$0xff]
        %v1519 = vld [vmem:[%s1491 + $0xd8] sm:$0xff]
        %v1520 = vld [vmem:[%s1491 + $0xe0] sm:$0xff]
        %v1521 = vld [vmem:[%s1491 + $0xe8] sm:$0xff]
        %v1522 = vld [vmem:[%s1491 + $0xf0] sm:$0xff]
        %v1523 = vld [vmem:[%s1491 + $0xf8] sm:$0xff]
        %s1524 = scalar_lea.vmem %s1, 32
        %v1525 = vld [vmem:[%s1524] sm:$0xff]
        %v1526 = vld [vmem:[%s1524 + $0x8] sm:$0xf]
        %v1528 = vsel %vm249, %v1492, 0
        %v1531 = vsel %vm249, %v1493, 0
        %v1534 = vsel %vm249, %v1494, 0
        %v1537 = vsel %vm249, %v1495, 0
        %v1540 = vsel %vm249, %v1496, 0
        %v1543 = vsel %vm249, %v1497, 0
        %v1546 = vsel %vm249, %v1498, 0
        %v1549 = vsel %vm249, %v1499, 0
        %v1552 = vsel %vm249, %v1500, 0
        %v1555 = vsel %vm249, %v1501, 0
        %v1558 = vsel %vm249, %v1502, 0
        %v1561 = vsel %vm249, %v1503, 0
        %v1564 = vsel %vm249, %v1504, 0
        %v1567 = vsel %vm249, %v1505, 0
        %v1570 = vsel %vm249, %v1506, 0
        %v1573 = vsel %vm249, %v1507, 0
        %v1576 = vsel %vm249, %v1508, 0
        %v1579 = vsel %vm249, %v1509, 0
        %v1582 = vsel %vm249, %v1510, 0
        %v1585 = vsel %vm249, %v1511, 0
        %v1588 = vsel %vm249, %v1512, 0
        %v1591 = vsel %vm249, %v1513, 0
        %v1594 = vsel %vm249, %v1514, 0
        %v1597 = vsel %vm249, %v1515, 0
        %v1600 = vsel %vm249, %v1516, 0
        %v1603 = vsel %vm249, %v1517, 0
        %v1606 = vsel %vm249, %v1518, 0
        %v1609 = vsel %vm249, %v1519, 0
        %v1612 = vsel %vm249, %v1520, 0
        %v1615 = vsel %vm249, %v1521, 0
        %v1618 = vsel %vm249, %v1522, 0
        %v1621 = vsel %vm249, %v1523, 0
        %v1624 = vsel %vm938, %v1526, 0
        %1626 = vmatprep.subr.mxu0 0.0
        %1627 = vmatpush1.msra.mxu0 0.0
        %1628 = vmatprep.subr.mxu0 0.0
        %1629 = vmatpush1.msra.mxu0 0.0
        %1630 = vmatprep.subr.mxu0 0.0
        %1631 = vmatpush1.msra.mxu0 0.0
        %1632 = vmatprep.subr.mxu0 0.0
        %1633 = vmatpush1.msra.mxu0 0.0
        %1634 = vmatprep.subr.mxu0 0.0
        %1635 = vmatpush1.msra.mxu0 0.0
        %1636 = vmatprep.subr.mxu0 0.0
        %1637 = vmatpush1.msra.mxu0 0.0
        %1638 = vmatprep.subr.mxu0 0.0
        %1639 = vmatpush1.msra.mxu0 0.0
        %1640 = vmatprep.subr.mxu0 0.0
        %1641 = vmatpush1.msra.mxu0 0.0
        %1642 = vmatprep.subr.mxu0 0.0
        %1643 = vmatpush1.msra.mxu0 0.0
        %1644 = vmatprep.subr.mxu0 0.0
        %1645 = vmatpush1.msra.mxu0 0.0
        %1646 = vmatprep.subr.mxu0 0.0
        %1647 = vmatpush1.msra.mxu0 0.0
        %1648 = vmatprep.subr.mxu0 0.0
        %1649 = vmatpush1.msra.mxu0 0.0
        %1650 = vmatprep.subr.mxu0 0.0
        %1651 = vmatpush1.msra.mxu0 0.0
        %1652 = vmatprep.subr.mxu0 0.0
        %1653 = vmatpush1.msra.mxu0 0.0
        %1654 = vmatprep.subr.mxu0 0.0
        %1655 = vmatpush1.msra.mxu0 %v1624
        %1656 = vmatprep.subr.mxu0 0.0
        %1657 = vmatpush1.msra.mxu0 %v1525
        %1658 = vmatprep.subr.mxu0 0.0
        %1659 = vmatpush2.msra.mxu0 0.0
        %1660 = vmatprep.subr.mxu0 0.0
        %1661 = vmatpush2.msra.mxu0 0.0
        %1662 = vmatprep.subr.mxu0 0.0
        %1663 = vmatpush2.msra.mxu0 0.0
        %1664 = vmatprep.subr.mxu0 0.0
        %1665 = vmatpush2.msra.mxu0 0.0
        %1666 = vmatprep.subr.mxu0 0.0
        %1667 = vmatpush2.msra.mxu0 0.0
        %1668 = vmatprep.subr.mxu0 0.0
        %1669 = vmatpush2.msra.mxu0 0.0
        %1670 = vmatprep.subr.mxu0 0.0
        %1671 = vmatpush2.msra.mxu0 0.0
        %1672 = vmatprep.subr.mxu0 0.0
        %1673 = vmatpush2.msra.mxu0 0.0
        %1674 = vmatprep.subr.mxu0 0.0
        %1675 = vmatpush2.msra.mxu0 0.0
        %1676 = vmatprep.subr.mxu0 0.0
        %1677 = vmatpush2.msra.mxu0 0.0
        %1678 = vmatprep.subr.mxu0 0.0
        %1679 = vmatpush2.msra.mxu0 0.0
        %1680 = vmatprep.subr.mxu0 0.0
        %1681 = vmatpush2.msra.mxu0 0.0
        %1682 = vmatprep.subr.mxu0 0.0
        %1683 = vmatpush2.msra.mxu0 0.0
        %1684 = vmatprep.subr.mxu0 0.0
        %1685 = vmatpush2.msra.mxu0 0.0
        %1686 = vmatprep.subr.mxu0 0.0
        %1687 = vmatpush2.msra.mxu0 0.0
        %1688 = vmatprep.subr.mxu0 0.0
        %1689 = vmatpush2.msra.mxu0 0.0
        %1690 = vmatprep.mubr.f32.mxu0 0.0
        %1691 = vmatmul.mubr.f32.gmra.mxu0 %v1528
        %v1692 = vpop.f32.mrf.mxu0
        %v1693 = vadd.f32 0.0, %v1692
        %v1694 = vpop.f32.mrf.mxu0
        %1695 = vmatprep.mubr.f32.mxu0 0.0
        %1696 = vmatmul.mubr.f32.gmra.mxu0 %v1531
        %v1697 = vpop.f32.mrf.mxu0
        %v1698 = vadd.f32 0.0, %v1697
        %v1699 = vpop.f32.mrf.mxu0
        %1700 = vmatprep.mubr.f32.mxu0 0.0
        %1701 = vmatmul.mubr.f32.gmra.mxu0 %v1534
        %v1702 = vpop.f32.mrf.mxu0
        %v1703 = vadd.f32 0.0, %v1702
        %v1704 = vpop.f32.mrf.mxu0
        %1705 = vmatprep.mubr.f32.mxu0 0.0
        %1706 = vmatmul.mubr.f32.gmra.mxu0 %v1537
        %v1707 = vpop.f32.mrf.mxu0
        %v1708 = vadd.f32 0.0, %v1707
        %v1709 = vpop.f32.mrf.mxu0
        %1710 = vmatprep.mubr.f32.mxu0 0.0
        %1711 = vmatmul.mubr.f32.gmra.mxu0 %v1540
        %v1712 = vpop.f32.mrf.mxu0
        %v1713 = vadd.f32 0.0, %v1712
        %v1714 = vpop.f32.mrf.mxu0
        %1715 = vmatprep.mubr.f32.mxu0 0.0
        %1716 = vmatmul.mubr.f32.gmra.mxu0 %v1543
        %v1717 = vpop.f32.mrf.mxu0
        %v1718 = vadd.f32 0.0, %v1717
        %v1719 = vpop.f32.mrf.mxu0
        %1720 = vmatprep.mubr.f32.mxu0 0.0
        %1721 = vmatmul.mubr.f32.gmra.mxu0 %v1546
        %v1722 = vpop.f32.mrf.mxu0
        %v1723 = vadd.f32 0.0, %v1722
        %v1724 = vpop.f32.mrf.mxu0
        %1725 = vmatprep.mubr.f32.mxu0 0.0
        %1726 = vmatmul.mubr.f32.gmra.mxu0 %v1549
        %v1727 = vpop.f32.mrf.mxu0
        %v1728 = vadd.f32 0.0, %v1727
        %v1729 = vpop.f32.mrf.mxu0
        %1730 = vmatprep.mubr.f32.mxu0 0.0
        %1731 = vmatmul.mubr.f32.gmra.mxu0 %v1552
        %v1732 = vpop.f32.mrf.mxu0
        %v1733 = vadd.f32 0.0, %v1732
        %v1734 = vpop.f32.mrf.mxu0
        %1735 = vmatprep.mubr.f32.mxu0 0.0
        %1736 = vmatmul.mubr.f32.gmra.mxu0 %v1555
        %v1737 = vpop.f32.mrf.mxu0
        %v1738 = vadd.f32 0.0, %v1737
        %v1739 = vpop.f32.mrf.mxu0
        %1740 = vmatprep.mubr.f32.mxu0 0.0
        %1741 = vmatmul.mubr.f32.gmra.mxu0 %v1558
        %v1742 = vpop.f32.mrf.mxu0
        %v1743 = vadd.f32 0.0, %v1742
        %v1744 = vpop.f32.mrf.mxu0
        %1745 = vmatprep.mubr.f32.mxu0 0.0
        %1746 = vmatmul.mubr.f32.gmra.mxu0 %v1561
        %v1747 = vpop.f32.mrf.mxu0
        %v1748 = vadd.f32 0.0, %v1747
        %v1749 = vpop.f32.mrf.mxu0
        %1750 = vmatprep.mubr.f32.mxu0 0.0
        %1751 = vmatmul.mubr.f32.gmra.mxu0 %v1564
        %v1752 = vpop.f32.mrf.mxu0
        %v1753 = vadd.f32 0.0, %v1752
        %v1754 = vpop.f32.mrf.mxu0
        %1755 = vmatprep.mubr.f32.mxu0 0.0
        %1756 = vmatmul.mubr.f32.gmra.mxu0 %v1567
        %v1757 = vpop.f32.mrf.mxu0
        %v1758 = vadd.f32 0.0, %v1757
        %v1759 = vpop.f32.mrf.mxu0
        %1760 = vmatprep.mubr.f32.mxu0 0.0
        %1761 = vmatmul.mubr.f32.gmra.mxu0 %v1570
        %v1762 = vpop.f32.mrf.mxu0
        %v1763 = vadd.f32 0.0, %v1762
        %v1764 = vpop.f32.mrf.mxu0
        %1765 = vmatprep.mubr.f32.mxu0 0.0
        %1766 = vmatmul.mubr.f32.gmra.mxu0 %v1573
        %v1767 = vpop.f32.mrf.mxu0
        %v1768 = vadd.f32 0.0, %v1767
        %v1769 = vpop.f32.mrf.mxu0
        %1770 = vmatprep.mubr.f32.mxu0 0.0
        %1771 = vmatmul.mubr.f32.gmra.mxu0 %v1576
        %v1772 = vpop.f32.mrf.mxu0
        %v1773 = vadd.f32 0.0, %v1772
        %v1774 = vpop.f32.mrf.mxu0
        %1775 = vmatprep.mubr.f32.mxu0 0.0
        %1776 = vmatmul.mubr.f32.gmra.mxu0 %v1579
        %v1777 = vpop.f32.mrf.mxu0
        %v1778 = vadd.f32 0.0, %v1777
        %v1779 = vpop.f32.mrf.mxu0
        %1780 = vmatprep.mubr.f32.mxu0 0.0
        %1781 = vmatmul.mubr.f32.gmra.mxu0 %v1582
        %v1782 = vpop.f32.mrf.mxu0
        %v1783 = vadd.f32 0.0, %v1782
        %v1784 = vpop.f32.mrf.mxu0
        %1785 = vmatprep.mubr.f32.mxu0 0.0
        %1786 = vmatmul.mubr.f32.gmra.mxu0 %v1585
        %v1787 = vpop.f32.mrf.mxu0
        %v1788 = vadd.f32 0.0, %v1787
        %v1789 = vpop.f32.mrf.mxu0
        %1790 = vmatprep.mubr.f32.mxu0 0.0
        %1791 = vmatmul.mubr.f32.gmra.mxu0 %v1588
        %v1792 = vpop.f32.mrf.mxu0
        %v1793 = vadd.f32 0.0, %v1792
        %v1794 = vpop.f32.mrf.mxu0
        %1795 = vmatprep.mubr.f32.mxu0 0.0
        %1796 = vmatmul.mubr.f32.gmra.mxu0 %v1591
        %v1797 = vpop.f32.mrf.mxu0
        %v1798 = vadd.f32 0.0, %v1797
        %v1799 = vpop.f32.mrf.mxu0
        %1800 = vmatprep.mubr.f32.mxu0 0.0
        %1801 = vmatmul.mubr.f32.gmra.mxu0 %v1594
        %v1802 = vpop.f32.mrf.mxu0
        %v1803 = vadd.f32 0.0, %v1802
        %v1804 = vpop.f32.mrf.mxu0
        %1805 = vmatprep.mubr.f32.mxu0 0.0
        %1806 = vmatmul.mubr.f32.gmra.mxu0 %v1597
        %v1807 = vpop.f32.mrf.mxu0
        %v1808 = vadd.f32 0.0, %v1807
        %v1809 = vpop.f32.mrf.mxu0
        %1810 = vmatprep.mubr.f32.mxu0 0.0
        %1811 = vmatmul.mubr.f32.gmra.mxu0 %v1600
        %v1812 = vpop.f32.mrf.mxu0
        %v1813 = vadd.f32 0.0, %v1812
        %v1814 = vpop.f32.mrf.mxu0
        %1815 = vmatprep.mubr.f32.mxu0 0.0
        %1816 = vmatmul.mubr.f32.gmra.mxu0 %v1603
        %v1817 = vpop.f32.mrf.mxu0
        %v1818 = vadd.f32 0.0, %v1817
        %v1819 = vpop.f32.mrf.mxu0
        %1820 = vmatprep.mubr.f32.mxu0 0.0
        %1821 = vmatmul.mubr.f32.gmra.mxu0 %v1606
        %v1822 = vpop.f32.mrf.mxu0
        %v1823 = vadd.f32 0.0, %v1822
        %v1824 = vpop.f32.mrf.mxu0
        %1825 = vmatprep.mubr.f32.mxu0 0.0
        %1826 = vmatmul.mubr.f32.gmra.mxu0 %v1609
        %v1827 = vpop.f32.mrf.mxu0
        %v1828 = vadd.f32 0.0, %v1827
        %v1829 = vpop.f32.mrf.mxu0
        %1830 = vmatprep.mubr.f32.mxu0 0.0
        %1831 = vmatmul.mubr.f32.gmra.mxu0 %v1612
        %v1832 = vpop.f32.mrf.mxu0
        %v1833 = vadd.f32 0.0, %v1832
        %v1834 = vpop.f32.mrf.mxu0
        %1835 = vmatprep.mubr.f32.mxu0 0.0
        %1836 = vmatmul.mubr.f32.gmra.mxu0 %v1615
        %v1837 = vpop.f32.mrf.mxu0
        %v1838 = vadd.f32 0.0, %v1837
        %v1839 = vpop.f32.mrf.mxu0
        %1840 = vmatprep.mubr.f32.mxu0 0.0
        %1841 = vmatmul.mubr.f32.gmra.mxu0 %v1618
        %v1842 = vpop.f32.mrf.mxu0
        %v1843 = vadd.f32 0.0, %v1842
        %v1844 = vpop.f32.mrf.mxu0
        %1845 = vmatprep.mubr.f32.mxu0 0.0
        %1846 = vmatmul.mubr.f32.gmra.mxu0 %v1621
        %v1847 = vpop.f32.mrf.mxu0
        %v1848 = vadd.f32 0.0, %v1847
        %v1849 = vpop.f32.mrf.mxu0
        %1850 = vdwg.mxu0
        %v1851 = vadd.f32 %v1333, %v1693
        %v1852 = vadd.f32 %v1338, %v1698
        %v1853 = vadd.f32 %v1343, %v1703
        %v1854 = vadd.f32 %v1348, %v1708
        %v1855 = vadd.f32 %v1353, %v1713
        %v1856 = vadd.f32 %v1358, %v1718
        %v1857 = vadd.f32 %v1363, %v1723
        %v1858 = vadd.f32 %v1368, %v1728
        %v1859 = vadd.f32 %v1373, %v1733
        %v1860 = vadd.f32 %v1378, %v1738
        %v1861 = vadd.f32 %v1383, %v1743
        %v1862 = vadd.f32 %v1388, %v1748
        %v1863 = vadd.f32 %v1393, %v1753
        %v1864 = vadd.f32 %v1398, %v1758
        %v1865 = vadd.f32 %v1403, %v1763
        %v1866 = vadd.f32 %v1408, %v1768
        %v1867 = vadd.f32 %v1413, %v1773
        %v1868 = vadd.f32 %v1418, %v1778
        %v1869 = vadd.f32 %v1423, %v1783
        %v1870 = vadd.f32 %v1428, %v1788
        %v1871 = vadd.f32 %v1433, %v1793
        %v1872 = vadd.f32 %v1438, %v1798
        %v1873 = vadd.f32 %v1443, %v1803
        %v1874 = vadd.f32 %v1448, %v1808
        %v1875 = vadd.f32 %v1453, %v1813
        %v1876 = vadd.f32 %v1458, %v1818
        %v1877 = vadd.f32 %v1463, %v1823
        %v1878 = vadd.f32 %v1468, %v1828
        %v1879 = vadd.f32 %v1473, %v1833
        %v1880 = vadd.f32 %v1478, %v1838
        %v1881 = vadd.f32 %v1483, %v1843
        %v1882 = vadd.f32 %v1488, %v1848
        %1883 = vst.msk [vmem:[%s216] sm:$0xff] %vm385, %v1851
        %1884 = vst.msk [vmem:[%s216 + $0x8] sm:$0xff] %vm385, %v1852
        %1885 = vst.msk [vmem:[%s216 + $0x10] sm:$0xff] %vm385, %v1853
        %1886 = vst.msk [vmem:[%s216 + $0x18] sm:$0xff] %vm385, %v1854
        %1887 = vst.msk [vmem:[%s216 + $0x20] sm:$0xff] %vm385, %v1855
        %1888 = vst.msk [vmem:[%s216 + $0x28] sm:$0xff] %vm385, %v1856
        %1889 = vst.msk [vmem:[%s216 + $0x30] sm:$0xff] %vm385, %v1857
        %1890 = vst.msk [vmem:[%s216 + $0x38] sm:$0xff] %vm385, %v1858
        %1891 = vst.msk [vmem:[%s216 + $0x40] sm:$0xff] %vm385, %v1859
        %1892 = vst.msk [vmem:[%s216 + $0x48] sm:$0xff] %vm385, %v1860
        %1893 = vst.msk [vmem:[%s216 + $0x50] sm:$0xff] %vm385, %v1861
        %1894 = vst.msk [vmem:[%s216 + $0x58] sm:$0xff] %vm385, %v1862
        %1895 = vst.msk [vmem:[%s216 + $0x60] sm:$0xff] %vm385, %v1863
        %1896 = vst.msk [vmem:[%s216 + $0x68] sm:$0xff] %vm385, %v1864
        %1897 = vst.msk [vmem:[%s216 + $0x70] sm:$0xff] %vm385, %v1865
        %1898 = vst.msk [vmem:[%s216 + $0x78] sm:$0xff] %vm385, %v1866
        %1899 = vst.msk [vmem:[%s216 + $0x80] sm:$0xff] %vm385, %v1867
        %1900 = vst.msk [vmem:[%s216 + $0x88] sm:$0xff] %vm385, %v1868
        %1901 = vst.msk [vmem:[%s216 + $0x90] sm:$0xff] %vm385, %v1869
        %1902 = vst.msk [vmem:[%s216 + $0x98] sm:$0xff] %vm385, %v1870
        %1903 = vst.msk [vmem:[%s216 + $0xa0] sm:$0xff] %vm385, %v1871
        %1904 = vst.msk [vmem:[%s216 + $0xa8] sm:$0xff] %vm385, %v1872
        %1905 = vst.msk [vmem:[%s216 + $0xb0] sm:$0xff] %vm385, %v1873
        %1906 = vst.msk [vmem:[%s216 + $0xb8] sm:$0xff] %vm385, %v1874
        %1907 = vst.msk [vmem:[%s216 + $0xc0] sm:$0xff] %vm385, %v1875
        %1908 = vst.msk [vmem:[%s216 + $0xc8] sm:$0xff] %vm385, %v1876
        %1909 = vst.msk [vmem:[%s216 + $0xd0] sm:$0xff] %vm385, %v1877
        %1910 = vst.msk [vmem:[%s216 + $0xd8] sm:$0xff] %vm385, %v1878
        %1911 = vst.msk [vmem:[%s216 + $0xe0] sm:$0xff] %vm385, %v1879
        %1912 = vst.msk [vmem:[%s216 + $0xe8] sm:$0xff] %vm385, %v1880
        %1913 = vst.msk [vmem:[%s216 + $0xf0] sm:$0xff] %vm385, %v1881
        %1914 = vst.msk [vmem:[%s216 + $0xf8] sm:$0xff] %vm385, %v1882
        %v1915 = vsel %vm385, %v1851, 0.0
        %v1916 = vsel %vm385, %v1852, 0.0
        %v1917 = vadd.f32 %v1915, %v1916
        %v1918 = vsel %vm385, %v1853, 0.0
        %v1919 = vadd.f32 %v1917, %v1918
        %v1920 = vsel %vm385, %v1854, 0.0
        %v1921 = vadd.f32 %v1919, %v1920
        %v1922 = vsel %vm385, %v1855, 0.0
        %v1923 = vadd.f32 %v1921, %v1922
        %v1924 = vsel %vm385, %v1856, 0.0
        %v1925 = vadd.f32 %v1923, %v1924
        %v1926 = vsel %vm385, %v1857, 0.0
        %v1927 = vadd.f32 %v1925, %v1926
        %v1928 = vsel %vm385, %v1858, 0.0
        %v1929 = vadd.f32 %v1927, %v1928
        %v1930 = vsel %vm385, %v1859, 0.0
        %v1931 = vadd.f32 %v1929, %v1930
        %v1932 = vsel %vm385, %v1860, 0.0
        %v1933 = vadd.f32 %v1931, %v1932
        %v1934 = vsel %vm385, %v1861, 0.0
        %v1935 = vadd.f32 %v1933, %v1934
        %v1936 = vsel %vm385, %v1862, 0.0
        %v1937 = vadd.f32 %v1935, %v1936
        %v1938 = vsel %vm385, %v1863, 0.0
        %v1939 = vadd.f32 %v1937, %v1938
        %v1940 = vsel %vm385, %v1864, 0.0
        %v1941 = vadd.f32 %v1939, %v1940
        %v1942 = vsel %vm385, %v1865, 0.0
        %v1943 = vadd.f32 %v1941, %v1942
        %v1944 = vsel %vm385, %v1866, 0.0
        %v1945 = vadd.f32 %v1943, %v1944
        %v1946 = vsel %vm385, %v1867, 0.0
        %v1947 = vadd.f32 %v1945, %v1946
        %v1948 = vsel %vm385, %v1868, 0.0
        %v1949 = vadd.f32 %v1947, %v1948
        %v1950 = vsel %vm385, %v1869, 0.0
        %v1951 = vadd.f32 %v1949, %v1950
        %v1952 = vsel %vm385, %v1870, 0.0
        %v1953 = vadd.f32 %v1951, %v1952
        %v1954 = vsel %vm385, %v1871, 0.0
        %v1955 = vadd.f32 %v1953, %v1954
        %v1956 = vsel %vm385, %v1872, 0.0
        %v1957 = vadd.f32 %v1955, %v1956
        %v1958 = vsel %vm385, %v1873, 0.0
        %v1959 = vadd.f32 %v1957, %v1958
        %v1960 = vsel %vm385, %v1874, 0.0
        %v1961 = vadd.f32 %v1959, %v1960
        %v1962 = vsel %vm385, %v1875, 0.0
        %v1963 = vadd.f32 %v1961, %v1962
        %v1964 = vsel %vm385, %v1876, 0.0
        %v1965 = vadd.f32 %v1963, %v1964
        %v1966 = vsel %vm385, %v1877, 0.0
        %v1967 = vadd.f32 %v1965, %v1966
        %v1968 = vsel %vm385, %v1878, 0.0
        %v1969 = vadd.f32 %v1967, %v1968
        %v1970 = vsel %vm385, %v1879, 0.0
        %v1971 = vadd.f32 %v1969, %v1970
        %v1972 = vsel %vm385, %v1880, 0.0
        %v1973 = vadd.f32 %v1971, %v1972
        %v1974 = vsel %vm385, %v1881, 0.0
        %v1975 = vadd.f32 %v1973, %v1974
        %v1976 = vsel %vm385, %v1882, 0.0
        %v1977 = vadd.f32 %v1975, %v1976
        %v1978 = vrot.slane %v1977, 4
        %v1979 = vadd.f32 %v1977, %v1978
        %v1980 = vrot.slane %v1979, 2
        %v1981 = vadd.f32 %v1979, %v1980
        %v1982 = vrot.slane %v1981, 1
        %v1983 = vadd.f32 %v1981, %v1982
        %vm1984 = vcmask 24576
        %1985 = vst.msk [vmem:[%s200] sm:$0x1] %vm1984, %v1983
        %v1986 = vmul.f32 %v1851, %v1851
        %v1987 = vmul.f32 %v1852, %v1852
        %v1988 = vmul.f32 %v1853, %v1853
        %v1989 = vmul.f32 %v1854, %v1854
        %v1990 = vmul.f32 %v1855, %v1855
        %v1991 = vmul.f32 %v1856, %v1856
        %v1992 = vmul.f32 %v1857, %v1857
        %v1993 = vmul.f32 %v1858, %v1858
        %v1994 = vmul.f32 %v1859, %v1859
        %v1995 = vmul.f32 %v1860, %v1860
        %v1996 = vmul.f32 %v1861, %v1861
        %v1997 = vmul.f32 %v1862, %v1862
        %v1998 = vmul.f32 %v1863, %v1863
        %v1999 = vmul.f32 %v1864, %v1864
        %v2000 = vmul.f32 %v1865, %v1865
        %v2001 = vmul.f32 %v1866, %v1866
        %v2002 = vmul.f32 %v1867, %v1867
        %v2003 = vmul.f32 %v1868, %v1868
        %v2004 = vmul.f32 %v1869, %v1869
        %v2005 = vmul.f32 %v1870, %v1870
        %v2006 = vmul.f32 %v1871, %v1871
        %v2007 = vmul.f32 %v1872, %v1872
        %v2008 = vmul.f32 %v1873, %v1873
        %v2009 = vmul.f32 %v1874, %v1874
        %v2010 = vmul.f32 %v1875, %v1875
        %v2011 = vmul.f32 %v1876, %v1876
        %v2012 = vmul.f32 %v1877, %v1877
        %v2013 = vmul.f32 %v1878, %v1878
        %v2014 = vmul.f32 %v1879, %v1879
        %v2015 = vmul.f32 %v1880, %v1880
        %v2016 = vmul.f32 %v1881, %v1881
        %v2017 = vmul.f32 %v1882, %v1882
        %v2018 = vsel %vm385, %v1986, 0.0
        %v2019 = vsel %vm385, %v1987, 0.0
        %v2020 = vadd.f32 %v2018, %v2019
        %v2021 = vsel %vm385, %v1988, 0.0
        %v2022 = vadd.f32 %v2020, %v2021
        %v2023 = vsel %vm385, %v1989, 0.0
        %v2024 = vadd.f32 %v2022, %v2023
        %v2025 = vsel %vm385, %v1990, 0.0
        %v2026 = vadd.f32 %v2024, %v2025
        %v2027 = vsel %vm385, %v1991, 0.0
        %v2028 = vadd.f32 %v2026, %v2027
        %v2029 = vsel %vm385, %v1992, 0.0
        %v2030 = vadd.f32 %v2028, %v2029
        %v2031 = vsel %vm385, %v1993, 0.0
        %v2032 = vadd.f32 %v2030, %v2031
        %v2033 = vsel %vm385, %v1994, 0.0
        %v2034 = vadd.f32 %v2032, %v2033
        %v2035 = vsel %vm385, %v1995, 0.0
        %v2036 = vadd.f32 %v2034, %v2035
        %v2037 = vsel %vm385, %v1996, 0.0
        %v2038 = vadd.f32 %v2036, %v2037
        %v2039 = vsel %vm385, %v1997, 0.0
        %v2040 = vadd.f32 %v2038, %v2039
        %v2041 = vsel %vm385, %v1998, 0.0
        %v2042 = vadd.f32 %v2040, %v2041
        %v2043 = vsel %vm385, %v1999, 0.0
        %v2044 = vadd.f32 %v2042, %v2043
        %v2045 = vsel %vm385, %v2000, 0.0
        %v2046 = vadd.f32 %v2044, %v2045
        %v2047 = vsel %vm385, %v2001, 0.0
        %v2048 = vadd.f32 %v2046, %v2047
        %v2049 = vsel %vm385, %v2002, 0.0
        %v2050 = vadd.f32 %v2048, %v2049
        %v2051 = vsel %vm385, %v2003, 0.0
        %v2052 = vadd.f32 %v2050, %v2051
        %v2053 = vsel %vm385, %v2004, 0.0
        %v2054 = vadd.f32 %v2052, %v2053
        %v2055 = vsel %vm385, %v2005, 0.0
        %v2056 = vadd.f32 %v2054, %v2055
        %v2057 = vsel %vm385, %v2006, 0.0
        %v2058 = vadd.f32 %v2056, %v2057
        %v2059 = vsel %vm385, %v2007, 0.0
        %v2060 = vadd.f32 %v2058, %v2059
        %v2061 = vsel %vm385, %v2008, 0.0
        %v2062 = vadd.f32 %v2060, %v2061
        %v2063 = vsel %vm385, %v2009, 0.0
        %v2064 = vadd.f32 %v2062, %v2063
        %v2065 = vsel %vm385, %v2010, 0.0
        %v2066 = vadd.f32 %v2064, %v2065
        %v2067 = vsel %vm385, %v2011, 0.0
        %v2068 = vadd.f32 %v2066, %v2067
        %v2069 = vsel %vm385, %v2012, 0.0
        %v2070 = vadd.f32 %v2068, %v2069
        %v2071 = vsel %vm385, %v2013, 0.0
        %v2072 = vadd.f32 %v2070, %v2071
        %v2073 = vsel %vm385, %v2014, 0.0
        %v2074 = vadd.f32 %v2072, %v2073
        %v2075 = vsel %vm385, %v2015, 0.0
        %v2076 = vadd.f32 %v2074, %v2075
        %v2077 = vsel %vm385, %v2016, 0.0
        %v2078 = vadd.f32 %v2076, %v2077
        %v2079 = vsel %vm385, %v2017, 0.0
        %v2080 = vadd.f32 %v2078, %v2079
        %v2081 = vrot.slane %v2080, 4
        %v2082 = vadd.f32 %v2080, %v2081
        %v2083 = vrot.slane %v2082, 2
        %v2084 = vadd.f32 %v2082, %v2083
        %v2085 = vrot.slane %v2084, 1
        %v2086 = vadd.f32 %v2084, %v2085
        %2087 = vst.msk [vmem:[%s206] sm:$0x1] %vm1984, %v2086
        %p2088 = scmp.lt.s32.totalorder %s22, 1
        %s2089 = scalar_select %p2088, %s22, 1
        %s2090 = smul.addr %s2089, 32
        %s2091 = smul.addr %s2090, 8
        %s2092 = scalar_lea.vmem %s2, %s2091
        %s2093 = sand.u32 %s103, 1
        %s2094 = scalar_lea.sflag [#allocation4], %s2093
        %s2095 = sand.u32 %s103, 1
        %s2096 = scalar_lea.vmem [#allocation3], %s2095
        %s2097 = sand.u32 %s129, 1
        %s2098 = scalar_lea.sflag [#allocation6], %s2097
        %s2099 = sand.u32 %s129, 1
        %s2100 = scalar_lea.vmem [#allocation5], %s2099
        // Predicated region
        $region29: #{tpu_custom_call.1} parent=27 // pred_check
          %p2101 = pneg %p87
        $region30: #{tpu_custom_call.1} parent=27 // pred_check_branch
          %2103 = sbr.rel (%p2101) target = $region32
        $region31: #{tpu_custom_call.1} parent=27 // pred_region
          _
        $region32: #{tpu_custom_call.1} parent=27 // pred_fallthru
          _
        // Predicated region
        $region33: #{tpu_custom_call.1} parent=27 // pred_check
          %p2104 = pneg %p113
        $region34: #{tpu_custom_call.1} parent=27 // pred_check_branch
          %2106 = sbr.rel (%p2104) target = $region36
        $region35: #{tpu_custom_call.1} parent=27 // pred_region
          %s2108 = ssub.s32 16, 16
          %2109 = vsyncadd %s2094, %s2108
          %s2110 = smul.addr %s22, 16
          %s2111 = scalar_lea.hbm %s3, %s2110
          %s2113 = sshll.u32 %s2096, 4
          %s2114 = int_to_ptr.vmem [resolvable:$true] %s2113
          %2116 = dma.vmem_to_hbm [thread:$0]  %s2114, 16, %s2111, %s2094
        $region36: #{tpu_custom_call.1} parent=27 // pred_fallthru
          _
        // Predicated region
        $region37: #{tpu_custom_call.1} parent=27 // pred_check
          %p2117 = pneg %p139
        $region38: #{tpu_custom_call.1} parent=27 // pred_check_branch
          %2119 = sbr.rel (%p2117) target = $region40
        $region39: #{tpu_custom_call.1} parent=27 // pred_region
          %s2121 = ssub.s32 16, 16
          %2122 = vsyncadd %s2098, %s2121
          %s2123 = smul.addr %s22, 16
          %s2124 = scalar_lea.hbm %s4, %s2123
          %s2126 = sshll.u32 %s2100, 4
          %s2127 = int_to_ptr.vmem [resolvable:$true] %s2126
          %2129 = dma.vmem_to_hbm [thread:$0]  %s2127, 16, %s2124, %s2098
        $region40: #{tpu_custom_call.1} parent=27 // pred_fallthru
          _
      $region28: #{tpu_custom_call.1} parent=5 // pred_fallthru
        _
      %p2130 = scmp.le.s32.totalorder 2, %s17
      // Predicated region
      $region41: #{tpu_custom_call.1} parent=5 // pred_check
        %p2131 = pneg %p2130
      $region42: #{tpu_custom_call.1} parent=5 // pred_check_branch
        %2133 = sbr.rel (%p2131) target = $region44
      $region43: #{tpu_custom_call.1} parent=5 // pred_region
        %s2134 = ssub.s32 %s17, 2
        // Predicated region
        $region45: #{tpu_custom_call.1} parent=43 // pred_check
          %p2135 = pneg %p93
        $region46: #{tpu_custom_call.1} parent=43 // pred_check_branch
          %2137 = sbr.rel (%p2135) target = $region48
        $region47: #{tpu_custom_call.1} parent=43 // pred_region
          %p2138 = scmp.lt.s32.totalorder %s23, 1
          %s2139 = scalar_select %p2138, %s23, 1
          %s2140 = smul.addr %s2139, 32
          %s2141 = smul.addr %s2140, 8
          %s2142 = scalar_lea.vmem %s2, %s2141
        $region48: #{tpu_custom_call.1} parent=43 // pred_fallthru
          _
        // Predicated region
        $region49: #{tpu_custom_call.1} parent=43 // pred_check
          %p2143 = pneg %p119
        $region50: #{tpu_custom_call.1} parent=43 // pred_check_branch
          %2145 = sbr.rel (%p2143) target = $region52
        $region51: #{tpu_custom_call.1} parent=43 // pred_region
          %s2146 = sand.u32 %s104, 1
          %s2147 = scalar_lea.sflag [#allocation4], %s2146
          %s2148 = sand.u32 %s104, 1
          %s2149 = scalar_lea.vmem [#allocation3], %s2148
          %2150 = dma.done %s2147, 16
        $region52: #{tpu_custom_call.1} parent=43 // pred_fallthru
          _
        // Predicated region
        $region53: #{tpu_custom_call.1} parent=43 // pred_check
          %p2151 = pneg %p145
        $region54: #{tpu_custom_call.1} parent=43 // pred_check_branch
          %2153 = sbr.rel (%p2151) target = $region56
        $region55: #{tpu_custom_call.1} parent=43 // pred_region
          %s2154 = sand.u32 %s130, 1
          %s2155 = scalar_lea.sflag [#allocation6], %s2154
          %s2156 = sand.u32 %s130, 1
          %s2157 = scalar_lea.vmem [#allocation5], %s2156
          %2158 = dma.done %s2155, 16
        $region56: #{tpu_custom_call.1} parent=43 // pred_fallthru
          _
      $region44: #{tpu_custom_call.1} parent=5 // pred_fallthru
        _
    $region6: #{tpu_custom_call.1} parent=1 // loop_footer
      %s21 = sadd.s32 1, %s17
    $region7: #{tpu_custom_call.1} parent=1 // loop_footer_branch
      %16 = sbr.rel target = $region3
    $region8: #{tpu_custom_call.1} parent=1 // loop_exit
      _
    %2159 = vsyncpa [#allocation4], 1
    %s2160 = scalar_lea.sflag [#allocation4], 1
    %2161 = vsyncpa %s2160, 1
    %2162 = vsyncpa [#allocation6], 1
    %s2163 = scalar_lea.sflag [#allocation6], 1
    %2164 = vsyncpa %s2163, 1

</llo_original>
